<compile_context>
chip_gen: v7x
topology: tpu7x:2x2x1
jax: 0.10.0
libtpu: 0.0.40
codegen_flags: <defaults>
</compile_context>

<pallas_src>
import numpy as np
import jax
import jax.numpy as jnp
from jax import lax
from jax.experimental import pallas as pl
from jax.experimental.pallas import tpu as pltpu


# --------------------------- resize weight matrices -------------------------

def bilinear_resize_matrix(in_size, out_size):
    """(out_size, in_size) bilinear interpolation matrix (align_corners=False,
    half-pixel centers), matching torch.nn.functional.interpolate(mode='bilinear')."""
    # TODO(synk): torchvision>=0.17 Resize defaults to antialias=True on tensors; the
    # antialiased triangle filter for downsampling is not modeled here (plain bilinear).
    i = np.arange(out_size, dtype=np.float64)
    src = (i + 0.5) * (in_size / out_size) - 0.5
    src = np.clip(src, 0.0, in_size - 1)
    i0 = np.floor(src).astype(np.int64)
    i1 = np.minimum(i0 + 1, in_size - 1)
    frac = src - i0
    mat = np.zeros((out_size, in_size), dtype=np.float64)
    mat[np.arange(out_size), i0] += 1.0 - frac
    mat[np.arange(out_size), i1] += frac
    return mat


def build_effective_weights(params, heads, dim_heads, h, w, height):
    """Fold (down-resize, softmax scale) into W_qkv and (out-proj, up-resize) into
    W_out / b_out.  vec_row(A @ X @ B^T) == kron(A, B) @ vec_row(X), so each resize is
    one Kronecker matrix; composition with the linear projections is exact."""
    scale = float(dim_heads) ** (-0.5)

    # down-resize (h, w) -> (height, height), flattened:  x_down = kron(Rh, Rw) @ x_flat
    kd = np.kron(bilinear_resize_matrix(h, height),
                 bilinear_resize_matrix(w, height))                 # (s*s, h*w)
    kd = jnp.asarray(kd, jnp.float32)
    w_qkv = jnp.concatenate([params["w_q"] * scale, params["w_kv"]], axis=1)
    w_qkv_eff = kd.T @ w_qkv                                        # (h*w, 3*dim_hidden)

    # up-resize (height, height) -> (h-2, w-2) folded into the output projection
    ku = np.kron(bilinear_resize_matrix(height, h - 2),
                 bilinear_resize_matrix(height, w - 2))             # ((h-2)*(w-2), s*s)
    ku = jnp.asarray(ku, jnp.float32)
    w_out_eff = params["w_out"] @ ku.T                              # (dim_hidden, (h-2)*(w-2))
    b_out_eff = ku @ params["b_out"]                                # ((h-2)*(w-2),)
    return w_qkv_eff, w_out_eff, b_out_eff


# ------------------------------- Pallas kernel ------------------------------

def make_fused_kernel(bb, c, heads, dim_heads, hw, out_hw):
    """bb = batches per grid step (merged into the row dim of the big matmuls)."""
    dh = heads * dim_heads
    e = dim_heads

    def kernel(x_ref, wqkv_ref, wout_ref, bout_ref, o_ref):
        # x_ref: (bb, c, hw)   wqkv_ref: (hw, 3*dh)   wout_ref: (dh, out_hw)
        # bout_ref: (1, out_hw)   o_ref: (bb, c, out_hw)
        x2 = x_ref[...].reshape(bb * c, hw)

        # fused (down-resize + Q/KV) projection for all bb batches at once;
        # softmax scale is pre-folded into the Q columns.  f32 MXU accumulation.
        qkv = jnp.dot(x2, wqkv_ref[...], preferred_element_type=jnp.float32)

        batch_outs = []
        for bi in range(bb):                                      # static unroll (tiny)
            rows = slice(bi * c, (bi + 1) * c)
            head_outs = []
            for hd in range(heads):                               # static unroll (tiny)
                q = qkv[rows, hd * e:(hd + 1) * e]
                k = qkv[rows, dh + hd * e: dh + (hd + 1) * e]
                v = qkv[rows, 2 * dh + hd * e: 2 * dh + (hd + 1) * e]

                # scores: contract on E directly — no k.T materialization.
                s = lax.dot_general(q, k, (((1,), (1,)), ((), ())),
                                    preferred_element_type=jnp.float32)   # (c, c)
                s = s - jnp.max(s, axis=-1, keepdims=True)
                p = jnp.exp(s)
                p = p * pl.reciprocal(jnp.sum(p, axis=-1, keepdims=True), approx=True)
                head_outs.append(
                    jnp.dot(p.astype(v.dtype), v,
                            preferred_element_type=jnp.float32))          # (c, e)
            batch_outs.append(jnp.concatenate(head_outs, axis=-1))        # (c, dh)

        attn = jnp.concatenate(batch_outs, axis=0)                         # (bb*c, dh)

        # fused (output projection + up-resize) + folded bias; single wide store.
        y = jnp.dot(attn.astype(wout_ref.dtype), wout_ref[...],
                    preferred_element_type=jnp.float32)
        y = y + bout_ref[...].astype(jnp.float32)
        o_ref[...] = y.reshape(bb, c, out_hw).astype(o_ref.dtype)

    return kernel


def fused_self_attention_resized(x_flat, w_qkv_eff, w_out_eff, b_out_eff,
                                 heads, dim_heads):
    b, c, hw = x_flat.shape
    out_hw = w_out_eff.shape[1]

    # Merge enough batches per grid step to fill an 8-sublane group in the two big
    # matmuls (the only real compute); keep bb a divisor of b so no padded steps.
    bb = 1 if c >= 8 else max(1, min(b, 8 // max(c, 1)))
    while b % bb:
        bb -= 1

    kernel = make_fused_kernel(bb, c, heads, dim_heads, hw, out_hw)
    return pl.pallas_call(
        kernel,
        out_shape=jax.ShapeDtypeStruct((b, c, out_hw), x_flat.dtype),
        grid=(b // bb,),
        in_specs=[
            pl.BlockSpec((bb, c, hw), lambda i: (i, 0, 0)),         # bb-batch x tile
            pl.BlockSpec(w_qkv_eff.shape, lambda i: (0, 0)),        # weights resident
            pl.BlockSpec(w_out_eff.shape, lambda i: (0, 0)),
            pl.BlockSpec((1, out_hw), lambda i: (0, 0)),
        ],
        out_specs=pl.BlockSpec((bb, c, out_hw), lambda i: (i, 0, 0)),
        compiler_params=pltpu.CompilerParams(dimension_semantics=("parallel",)),
    )(x_flat, w_qkv_eff, w_out_eff, b_out_eff.reshape(1, out_hw))


def self_attention_resized_forward(x, params, dim, heads):
    """Replicates SelfAttentionResized.forward.  x: (b, c, h, w)."""
    b, c, h, w = x.shape
    height = int(np.sqrt(dim))
    dim_heads = dim // heads
    w_qkv_eff, w_out_eff, b_out_eff = build_effective_weights(
        params, heads, dim_heads, h, w, height)
    out_flat = fused_self_attention_resized(
        x.reshape(b, c, h * w), w_qkv_eff, w_out_eff, b_out_eff, heads, dim_heads)
    return out_flat.reshape(b, c, h - 2, w - 2)


# ------------------------------ params / reference --------------------------

def init_params(key, dim, heads):
    dim_heads = dim // heads
    dh = dim_heads * heads
    k1, k2, k3, k4 = jax.random.split(key, 4)
    # weights stored as (in, out) so kernels compute x @ W directly
    return {
        "w_q":   jax.random.normal(k1, (dim, dh), jnp.float32) * 0.1,
        "w_kv":  jax.random.normal(k2, (dim, 2 * dh), jnp.float32) * 0.1,
        "w_out": jax.random.normal(k3, (dh, dim), jnp.float32) * 0.1,
        "b_out": jax.random.normal(k4, (dim,), jnp.float32) * 0.1,
    }


def reference_forward(x, params, dim, heads):
    """Pure-JAX, unfused reference (resize-as-matmul, separate projections, softmax)."""
    b, c, h, w = x.shape
    height = int(np.sqrt(dim))
    dim_heads = dim // heads
    dh = dim_heads * heads
    rdh = jnp.asarray(bilinear_resize_matrix(h, height), jnp.float32)
    rdw = jnp.asarray(bilinear_resize_matrix(w, height), jnp.float32)
    down = jnp.einsum("Hh,bchw,Ww->bcHW", rdh, x, rdw)
    xs = down.reshape(b, c, height * height)
    q = xs @ params["w_q"]
    kv = xs @ params["w_kv"]
    k, v = kv[..., :dh], kv[..., dh:]
    mh = lambda y: y.reshape(b, c, heads, dim_heads).transpose(0, 2, 1, 3).reshape(
        b * heads, c, dim_heads)
    qm, km, vm = mh(q), mh(k), mh(v)
    dots = jnp.einsum("bie,bje->bij", qm, km) * dim_heads ** (-0.5)
    p = jax.nn.softmax(dots, axis=-1)
    o = jnp.einsum("bij,bje->bie", p, vm)
    o = o.reshape(b, heads, c, dim_heads).transpose(0, 2, 1, 3).reshape(b, c, dh)
    o = o @ params["w_out"] + params["b_out"]
    oi = o.reshape(b, c, height, height)
    ruh = jnp.asarray(bilinear_resize_matrix(height, h - 2), jnp.float32)
    ruw = jnp.asarray(bilinear_resize_matrix(height, w - 2), jnp.float32)
    return jnp.einsum("Hh,bchw,Ww->bcHW", ruh, oi, ruw)


if __name__ == "__main__":
    # small shapes consistent with the module: (b, c, h, w) image, dim a perfect square
    batch, channels, h, w = 2, 4, 16, 16
    dim, heads = 64, 4            # height = sqrt(dim) = 8, dim_heads = 16

    key = jax.random.PRNGKey(0)
    kx, kp = jax.random.split(key)
    x = jax.random.normal(kx, (batch, channels, h, w), jnp.float32)
    params = init_params(kp, dim, heads)

    out = self_attention_resized_forward(x, params, dim, heads)
    out = jax.block_until_ready(out)

    ref = reference_forward(x, params, dim, heads)
    assert out.shape == (batch, channels, h - 2, w - 2)
    # approx-reciprocal softmax + folded-weight evaluation order -> modest tolerance
    err = float(jnp.max(jnp.abs(out - ref)))
    assert jnp.allclose(out, ref, atol=5e-3, rtol=5e-3), err

    print("KERNEL_OK")
</pallas_src>

<mosaic_0001>
module attributes {stable_mosaic.version = 11 : i64} {
  func.func @kernel(%arg0: i32, %arg1: memref<2x4x256xf32, #tpu.memory_space<vmem>>, %arg2: memref<256x192xf32, #tpu.memory_space<vmem>>, %arg3: memref<64x196xf32, #tpu.memory_space<vmem>>, %arg4: memref<1x196xf32, #tpu.memory_space<vmem>>, %arg5: memref<2x4x196xf32, #tpu.memory_space<vmem>>) attributes {dimension_semantics = [#tpu.dimension_semantics<parallel>], iteration_bounds = array<i64: 1>, scalar_prefetch = 0 : i64, scratch_operands = 0 : i64, tpu.core_type = #tpu.core_type<tc>, window_params = [{transform_indices = @transform_0, window_bounds = array<i64: 2, 4, 256>}, {pipeline_mode = #tpu.pipeline_mode<synchronous>, transform_indices = @transform_1, window_bounds = array<i64: 256, 192>}, {pipeline_mode = #tpu.pipeline_mode<synchronous>, transform_indices = @transform_2, window_bounds = array<i64: 64, 196>}, {pipeline_mode = #tpu.pipeline_mode<synchronous>, transform_indices = @transform_3, window_bounds = array<i64: 1, 196>}, {transform_indices = @transform_4, window_bounds = array<i64: 2, 4, 196>}]} {
    %c0 = arith.constant 0 : index
    %c0_0 = arith.constant 0 : index
    %c0_1 = arith.constant 0 : index
    %0 = vector.load %arg1[%c0, %c0_0, %c0_1] : memref<2x4x256xf32, #tpu.memory_space<vmem>>, vector<2x4x256xf32>
    %1 = vector.shape_cast %0 : vector<2x4x256xf32> to vector<8x256xf32>
    %c0_2 = arith.constant 0 : index
    %c0_3 = arith.constant 0 : index
    %2 = vector.load %arg2[%c0_2, %c0_3] : memref<256x192xf32, #tpu.memory_space<vmem>>, vector<256x192xf32>
    %cst = arith.constant dense<0.000000e+00> : vector<8x192xf32>
    %3 = tpu.matmul %1, %2, %cst {dimension_numbers = #tpu.dot_dimension_numbers<[1], [0], [0], [1], [0, 0, 1, 1], [], []>} : vector<8x256xf32>, vector<256x192xf32>, vector<8x192xf32> -> vector<8x192xf32>
    %4 = vector.extract_strided_slice %3 {offsets = [0, 0], sizes = [4, 16], strides = [1, 1]} : vector<8x192xf32> to vector<4x16xf32>
    %5 = vector.extract_strided_slice %3 {offsets = [0, 64], sizes = [4, 16], strides = [1, 1]} : vector<8x192xf32> to vector<4x16xf32>
    %6 = vector.extract_strided_slice %3 {offsets = [0, 128], sizes = [4, 16], strides = [1, 1]} : vector<8x192xf32> to vector<4x16xf32>
    %cst_4 = arith.constant dense<0.000000e+00> : vector<4x4xf32>
    %7 = tpu.matmul %4, %5, %cst_4 {dimension_numbers = #tpu.dot_dimension_numbers<[1], [1], [0], [0], [0, 0, 1, 0], [], []>} : vector<4x16xf32>, vector<4x16xf32>, vector<4x4xf32> -> vector<4x4xf32>
    %cst_5 = arith.constant dense<0xFF800000> : vector<4xf32>
    %8 = vector.multi_reduction <maximumf>, %7, %cst_5 [1] : vector<4x4xf32> to vector<4xf32>
    %9 = vector.shape_cast %8 : vector<4xf32> to vector<4x1xf32>
    %10 = vector.broadcast %9 : vector<4x1xf32> to vector<4x4xf32>
    %11 = arith.subf %7, %10 : vector<4x4xf32>
    %12 = math.exp %11 : vector<4x4xf32>
    %cst_6 = arith.constant dense<0.000000e+00> : vector<4xf32>
    %13 = vector.multi_reduction <add>, %12, %cst_6 [1] : vector<4x4xf32> to vector<4xf32>
    %14 = vector.shape_cast %13 : vector<4xf32> to vector<4x1xf32>
    %15 = tpu.reciprocal %14 {approx = true} : vector<4x1xf32> -> vector<4x1xf32>
    %16 = vector.broadcast %15 : vector<4x1xf32> to vector<4x4xf32>
    %17 = arith.mulf %12, %16 : vector<4x4xf32>
    %cst_7 = arith.constant dense<0.000000e+00> : vector<4x16xf32>
    %18 = tpu.matmul %17, %6, %cst_7 {dimension_numbers = #tpu.dot_dimension_numbers<[1], [0], [0], [1], [0, 0, 1, 1], [], []>} : vector<4x4xf32>, vector<4x16xf32>, vector<4x16xf32> -> vector<4x16xf32>
    %19 = vector.extract_strided_slice %3 {offsets = [0, 16], sizes = [4, 16], strides = [1, 1]} : vector<8x192xf32> to vector<4x16xf32>
    %20 = vector.extract_strided_slice %3 {offsets = [0, 80], sizes = [4, 16], strides = [1, 1]} : vector<8x192xf32> to vector<4x16xf32>
    %21 = vector.extract_strided_slice %3 {offsets = [0, 144], sizes = [4, 16], strides = [1, 1]} : vector<8x192xf32> to vector<4x16xf32>
    %cst_8 = arith.constant dense<0.000000e+00> : vector<4x4xf32>
    %22 = tpu.matmul %19, %20, %cst_8 {dimension_numbers = #tpu.dot_dimension_numbers<[1], [1], [0], [0], [0, 0, 1, 0], [], []>} : vector<4x16xf32>, vector<4x16xf32>, vector<4x4xf32> -> vector<4x4xf32>
    %cst_9 = arith.constant dense<0xFF800000> : vector<4xf32>
    %23 = vector.multi_reduction <maximumf>, %22, %cst_9 [1] : vector<4x4xf32> to vector<4xf32>
    %24 = vector.shape_cast %23 : vector<4xf32> to vector<4x1xf32>
    %25 = vector.broadcast %24 : vector<4x1xf32> to vector<4x4xf32>
    %26 = arith.subf %22, %25 : vector<4x4xf32>
    %27 = math.exp %26 : vector<4x4xf32>
    %cst_10 = arith.constant dense<0.000000e+00> : vector<4xf32>
    %28 = vector.multi_reduction <add>, %27, %cst_10 [1] : vector<4x4xf32> to vector<4xf32>
    %29 = vector.shape_cast %28 : vector<4xf32> to vector<4x1xf32>
    %30 = tpu.reciprocal %29 {approx = true} : vector<4x1xf32> -> vector<4x1xf32>
    %31 = vector.broadcast %30 : vector<4x1xf32> to vector<4x4xf32>
    %32 = arith.mulf %27, %31 : vector<4x4xf32>
    %cst_11 = arith.constant dense<0.000000e+00> : vector<4x16xf32>
    %33 = tpu.matmul %32, %21, %cst_11 {dimension_numbers = #tpu.dot_dimension_numbers<[1], [0], [0], [1], [0, 0, 1, 1], [], []>} : vector<4x4xf32>, vector<4x16xf32>, vector<4x16xf32> -> vector<4x16xf32>
    %34 = vector.extract_strided_slice %3 {offsets = [0, 32], sizes = [4, 16], strides = [1, 1]} : vector<8x192xf32> to vector<4x16xf32>
    %35 = vector.extract_strided_slice %3 {offsets = [0, 96], sizes = [4, 16], strides = [1, 1]} : vector<8x192xf32> to vector<4x16xf32>
    %36 = vector.extract_strided_slice %3 {offsets = [0, 160], sizes = [4, 16], strides = [1, 1]} : vector<8x192xf32> to vector<4x16xf32>
    %cst_12 = arith.constant dense<0.000000e+00> : vector<4x4xf32>
    %37 = tpu.matmul %34, %35, %cst_12 {dimension_numbers = #tpu.dot_dimension_numbers<[1], [1], [0], [0], [0, 0, 1, 0], [], []>} : vector<4x16xf32>, vector<4x16xf32>, vector<4x4xf32> -> vector<4x4xf32>
    %cst_13 = arith.constant dense<0xFF800000> : vector<4xf32>
    %38 = vector.multi_reduction <maximumf>, %37, %cst_13 [1] : vector<4x4xf32> to vector<4xf32>
    %39 = vector.shape_cast %38 : vector<4xf32> to vector<4x1xf32>
    %40 = vector.broadcast %39 : vector<4x1xf32> to vector<4x4xf32>
    %41 = arith.subf %37, %40 : vector<4x4xf32>
    %42 = math.exp %41 : vector<4x4xf32>
    %cst_14 = arith.constant dense<0.000000e+00> : vector<4xf32>
    %43 = vector.multi_reduction <add>, %42, %cst_14 [1] : vector<4x4xf32> to vector<4xf32>
    %44 = vector.shape_cast %43 : vector<4xf32> to vector<4x1xf32>
    %45 = tpu.reciprocal %44 {approx = true} : vector<4x1xf32> -> vector<4x1xf32>
    %46 = vector.broadcast %45 : vector<4x1xf32> to vector<4x4xf32>
    %47 = arith.mulf %42, %46 : vector<4x4xf32>
    %cst_15 = arith.constant dense<0.000000e+00> : vector<4x16xf32>
    %48 = tpu.matmul %47, %36, %cst_15 {dimension_numbers = #tpu.dot_dimension_numbers<[1], [0], [0], [1], [0, 0, 1, 1], [], []>} : vector<4x4xf32>, vector<4x16xf32>, vector<4x16xf32> -> vector<4x16xf32>
    %49 = vector.extract_strided_slice %3 {offsets = [0, 48], sizes = [4, 16], strides = [1, 1]} : vector<8x192xf32> to vector<4x16xf32>
    %50 = vector.extract_strided_slice %3 {offsets = [0, 112], sizes = [4, 16], strides = [1, 1]} : vector<8x192xf32> to vector<4x16xf32>
    %51 = vector.extract_strided_slice %3 {offsets = [0, 176], sizes = [4, 16], strides = [1, 1]} : vector<8x192xf32> to vector<4x16xf32>
    %cst_16 = arith.constant dense<0.000000e+00> : vector<4x4xf32>
    %52 = tpu.matmul %49, %50, %cst_16 {dimension_numbers = #tpu.dot_dimension_numbers<[1], [1], [0], [0], [0, 0, 1, 0], [], []>} : vector<4x16xf32>, vector<4x16xf32>, vector<4x4xf32> -> vector<4x4xf32>
    %cst_17 = arith.constant dense<0xFF800000> : vector<4xf32>
    %53 = vector.multi_reduction <maximumf>, %52, %cst_17 [1] : vector<4x4xf32> to vector<4xf32>
    %54 = vector.shape_cast %53 : vector<4xf32> to vector<4x1xf32>
    %55 = vector.broadcast %54 : vector<4x1xf32> to vector<4x4xf32>
    %56 = arith.subf %52, %55 : vector<4x4xf32>
    %57 = math.exp %56 : vector<4x4xf32>
    %cst_18 = arith.constant dense<0.000000e+00> : vector<4xf32>
    %58 = vector.multi_reduction <add>, %57, %cst_18 [1] : vector<4x4xf32> to vector<4xf32>
    %59 = vector.shape_cast %58 : vector<4xf32> to vector<4x1xf32>
    %60 = tpu.reciprocal %59 {approx = true} : vector<4x1xf32> -> vector<4x1xf32>
    %61 = vector.broadcast %60 : vector<4x1xf32> to vector<4x4xf32>
    %62 = arith.mulf %57, %61 : vector<4x4xf32>
    %cst_19 = arith.constant dense<0.000000e+00> : vector<4x16xf32>
    %63 = tpu.matmul %62, %51, %cst_19 {dimension_numbers = #tpu.dot_dimension_numbers<[1], [0], [0], [1], [0, 0, 1, 1], [], []>} : vector<4x4xf32>, vector<4x16xf32>, vector<4x16xf32> -> vector<4x16xf32>
    %64 = tpu.concatenate %18, %33, %48, %63 in 1 : vector<4x16xf32>, vector<4x16xf32>, vector<4x16xf32>, vector<4x16xf32> -> vector<4x64xf32>
    %65 = vector.extract_strided_slice %3 {offsets = [4, 0], sizes = [4, 16], strides = [1, 1]} : vector<8x192xf32> to vector<4x16xf32>
    %66 = vector.extract_strided_slice %3 {offsets = [4, 64], sizes = [4, 16], strides = [1, 1]} : vector<8x192xf32> to vector<4x16xf32>
    %67 = vector.extract_strided_slice %3 {offsets = [4, 128], sizes = [4, 16], strides = [1, 1]} : vector<8x192xf32> to vector<4x16xf32>
    %cst_20 = arith.constant dense<0.000000e+00> : vector<4x4xf32>
    %68 = tpu.matmul %65, %66, %cst_20 {dimension_numbers = #tpu.dot_dimension_numbers<[1], [1], [0], [0], [0, 0, 1, 0], [], []>} : vector<4x16xf32>, vector<4x16xf32>, vector<4x4xf32> -> vector<4x4xf32>
    %cst_21 = arith.constant dense<0xFF800000> : vector<4xf32>
    %69 = vector.multi_reduction <maximumf>, %68, %cst_21 [1] : vector<4x4xf32> to vector<4xf32>
    %70 = vector.shape_cast %69 : vector<4xf32> to vector<4x1xf32>
    %71 = vector.broadcast %70 : vector<4x1xf32> to vector<4x4xf32>
    %72 = arith.subf %68, %71 : vector<4x4xf32>
    %73 = math.exp %72 : vector<4x4xf32>
    %cst_22 = arith.constant dense<0.000000e+00> : vector<4xf32>
    %74 = vector.multi_reduction <add>, %73, %cst_22 [1] : vector<4x4xf32> to vector<4xf32>
    %75 = vector.shape_cast %74 : vector<4xf32> to vector<4x1xf32>
    %76 = tpu.reciprocal %75 {approx = true} : vector<4x1xf32> -> vector<4x1xf32>
    %77 = vector.broadcast %76 : vector<4x1xf32> to vector<4x4xf32>
    %78 = arith.mulf %73, %77 : vector<4x4xf32>
    %cst_23 = arith.constant dense<0.000000e+00> : vector<4x16xf32>
    %79 = tpu.matmul %78, %67, %cst_23 {dimension_numbers = #tpu.dot_dimension_numbers<[1], [0], [0], [1], [0, 0, 1, 1], [], []>} : vector<4x4xf32>, vector<4x16xf32>, vector<4x16xf32> -> vector<4x16xf32>
    %80 = vector.extract_strided_slice %3 {offsets = [4, 16], sizes = [4, 16], strides = [1, 1]} : vector<8x192xf32> to vector<4x16xf32>
    %81 = vector.extract_strided_slice %3 {offsets = [4, 80], sizes = [4, 16], strides = [1, 1]} : vector<8x192xf32> to vector<4x16xf32>
    %82 = vector.extract_strided_slice %3 {offsets = [4, 144], sizes = [4, 16], strides = [1, 1]} : vector<8x192xf32> to vector<4x16xf32>
    %cst_24 = arith.constant dense<0.000000e+00> : vector<4x4xf32>
    %83 = tpu.matmul %80, %81, %cst_24 {dimension_numbers = #tpu.dot_dimension_numbers<[1], [1], [0], [0], [0, 0, 1, 0], [], []>} : vector<4x16xf32>, vector<4x16xf32>, vector<4x4xf32> -> vector<4x4xf32>
    %cst_25 = arith.constant dense<0xFF800000> : vector<4xf32>
    %84 = vector.multi_reduction <maximumf>, %83, %cst_25 [1] : vector<4x4xf32> to vector<4xf32>
    %85 = vector.shape_cast %84 : vector<4xf32> to vector<4x1xf32>
    %86 = vector.broadcast %85 : vector<4x1xf32> to vector<4x4xf32>
    %87 = arith.subf %83, %86 : vector<4x4xf32>
    %88 = math.exp %87 : vector<4x4xf32>
    %cst_26 = arith.constant dense<0.000000e+00> : vector<4xf32>
    %89 = vector.multi_reduction <add>, %88, %cst_26 [1] : vector<4x4xf32> to vector<4xf32>
    %90 = vector.shape_cast %89 : vector<4xf32> to vector<4x1xf32>
    %91 = tpu.reciprocal %90 {approx = true} : vector<4x1xf32> -> vector<4x1xf32>
    %92 = vector.broadcast %91 : vector<4x1xf32> to vector<4x4xf32>
    %93 = arith.mulf %88, %92 : vector<4x4xf32>
    %cst_27 = arith.constant dense<0.000000e+00> : vector<4x16xf32>
    %94 = tpu.matmul %93, %82, %cst_27 {dimension_numbers = #tpu.dot_dimension_numbers<[1], [0], [0], [1], [0, 0, 1, 1], [], []>} : vector<4x4xf32>, vector<4x16xf32>, vector<4x16xf32> -> vector<4x16xf32>
    %95 = vector.extract_strided_slice %3 {offsets = [4, 32], sizes = [4, 16], strides = [1, 1]} : vector<8x192xf32> to vector<4x16xf32>
    %96 = vector.extract_strided_slice %3 {offsets = [4, 96], sizes = [4, 16], strides = [1, 1]} : vector<8x192xf32> to vector<4x16xf32>
    %97 = vector.extract_strided_slice %3 {offsets = [4, 160], sizes = [4, 16], strides = [1, 1]} : vector<8x192xf32> to vector<4x16xf32>
    %cst_28 = arith.constant dense<0.000000e+00> : vector<4x4xf32>
    %98 = tpu.matmul %95, %96, %cst_28 {dimension_numbers = #tpu.dot_dimension_numbers<[1], [1], [0], [0], [0, 0, 1, 0], [], []>} : vector<4x16xf32>, vector<4x16xf32>, vector<4x4xf32> -> vector<4x4xf32>
    %cst_29 = arith.constant dense<0xFF800000> : vector<4xf32>
    %99 = vector.multi_reduction <maximumf>, %98, %cst_29 [1] : vector<4x4xf32> to vector<4xf32>
    %100 = vector.shape_cast %99 : vector<4xf32> to vector<4x1xf32>
    %101 = vector.broadcast %100 : vector<4x1xf32> to vector<4x4xf32>
    %102 = arith.subf %98, %101 : vector<4x4xf32>
    %103 = math.exp %102 : vector<4x4xf32>
    %cst_30 = arith.constant dense<0.000000e+00> : vector<4xf32>
    %104 = vector.multi_reduction <add>, %103, %cst_30 [1] : vector<4x4xf32> to vector<4xf32>
    %105 = vector.shape_cast %104 : vector<4xf32> to vector<4x1xf32>
    %106 = tpu.reciprocal %105 {approx = true} : vector<4x1xf32> -> vector<4x1xf32>
    %107 = vector.broadcast %106 : vector<4x1xf32> to vector<4x4xf32>
    %108 = arith.mulf %103, %107 : vector<4x4xf32>
    %cst_31 = arith.constant dense<0.000000e+00> : vector<4x16xf32>
    %109 = tpu.matmul %108, %97, %cst_31 {dimension_numbers = #tpu.dot_dimension_numbers<[1], [0], [0], [1], [0, 0, 1, 1], [], []>} : vector<4x4xf32>, vector<4x16xf32>, vector<4x16xf32> -> vector<4x16xf32>
    %110 = vector.extract_strided_slice %3 {offsets = [4, 48], sizes = [4, 16], strides = [1, 1]} : vector<8x192xf32> to vector<4x16xf32>
    %111 = vector.extract_strided_slice %3 {offsets = [4, 112], sizes = [4, 16], strides = [1, 1]} : vector<8x192xf32> to vector<4x16xf32>
    %112 = vector.extract_strided_slice %3 {offsets = [4, 176], sizes = [4, 16], strides = [1, 1]} : vector<8x192xf32> to vector<4x16xf32>
    %cst_32 = arith.constant dense<0.000000e+00> : vector<4x4xf32>
    %113 = tpu.matmul %110, %111, %cst_32 {dimension_numbers = #tpu.dot_dimension_numbers<[1], [1], [0], [0], [0, 0, 1, 0], [], []>} : vector<4x16xf32>, vector<4x16xf32>, vector<4x4xf32> -> vector<4x4xf32>
    %cst_33 = arith.constant dense<0xFF800000> : vector<4xf32>
    %114 = vector.multi_reduction <maximumf>, %113, %cst_33 [1] : vector<4x4xf32> to vector<4xf32>
    %115 = vector.shape_cast %114 : vector<4xf32> to vector<4x1xf32>
    %116 = vector.broadcast %115 : vector<4x1xf32> to vector<4x4xf32>
    %117 = arith.subf %113, %116 : vector<4x4xf32>
    %118 = math.exp %117 : vector<4x4xf32>
    %cst_34 = arith.constant dense<0.000000e+00> : vector<4xf32>
    %119 = vector.multi_reduction <add>, %118, %cst_34 [1] : vector<4x4xf32> to vector<4xf32>
    %120 = vector.shape_cast %119 : vector<4xf32> to vector<4x1xf32>
    %121 = tpu.reciprocal %120 {approx = true} : vector<4x1xf32> -> vector<4x1xf32>
    %122 = vector.broadcast %121 : vector<4x1xf32> to vector<4x4xf32>
    %123 = arith.mulf %118, %122 : vector<4x4xf32>
    %cst_35 = arith.constant dense<0.000000e+00> : vector<4x16xf32>
    %124 = tpu.matmul %123, %112, %cst_35 {dimension_numbers = #tpu.dot_dimension_numbers<[1], [0], [0], [1], [0, 0, 1, 1], [], []>} : vector<4x4xf32>, vector<4x16xf32>, vector<4x16xf32> -> vector<4x16xf32>
    %125 = tpu.concatenate %79, %94, %109, %124 in 1 : vector<4x16xf32>, vector<4x16xf32>, vector<4x16xf32>, vector<4x16xf32> -> vector<4x64xf32>
    %126 = tpu.concatenate %64, %125 in 0 : vector<4x64xf32>, vector<4x64xf32> -> vector<8x64xf32>
    %c0_36 = arith.constant 0 : index
    %c0_37 = arith.constant 0 : index
    %127 = vector.load %arg3[%c0_36, %c0_37] : memref<64x196xf32, #tpu.memory_space<vmem>>, vector<64x196xf32>
    %cst_38 = arith.constant dense<0.000000e+00> : vector<8x196xf32>
    %128 = tpu.matmul %126, %127, %cst_38 {dimension_numbers = #tpu.dot_dimension_numbers<[1], [0], [0], [1], [0, 0, 1, 1], [], []>} : vector<8x64xf32>, vector<64x196xf32>, vector<8x196xf32> -> vector<8x196xf32>
    %c0_39 = arith.constant 0 : index
    %c0_40 = arith.constant 0 : index
    %129 = vector.load %arg4[%c0_39, %c0_40] : memref<1x196xf32, #tpu.memory_space<vmem>>, vector<1x196xf32>
    %130 = vector.broadcast %129 : vector<1x196xf32> to vector<8x196xf32>
    %131 = arith.addf %128, %130 : vector<8x196xf32>
    %132 = vector.shape_cast %131 : vector<8x196xf32> to vector<2x4x196xf32>
    %c0_41 = arith.constant 0 : index
    %c0_42 = arith.constant 0 : index
    %c0_43 = arith.constant 0 : index
    %133 = vector.load %arg5[%c0_41, %c0_42, %c0_43] : memref<2x4x196xf32, #tpu.memory_space<vmem>>, vector<2x4x196xf32>
    tpu.vector_store %arg5[%c0_41, %c0_42, %c0_43], %132 {strides = array<i32>} : memref<2x4x196xf32, #tpu.memory_space<vmem>>, vector<2x4x196xf32>,
    return
  }
  func.func @transform_0(%arg0: i32) -> (i32, i32, i32) {
    %c0_i32 = arith.constant 0 : i32
    %c0_i32_0 = arith.constant 0 : i32
    %c0_i32_1 = arith.constant 0 : i32
    return %arg0, %c0_i32, %c0_i32_0 : i32, i32, i32
  }
  func.func @transform_1(%arg0: i32) -> (i32, i32) {
    %c0_i32 = arith.constant 0 : i32
    %c0_i32_0 = arith.constant 0 : i32
    %c0_i32_1 = arith.constant 0 : i32
    return %c0_i32, %c0_i32_0 : i32, i32
  }
  func.func @transform_2(%arg0: i32) -> (i32, i32) {
    %c0_i32 = arith.constant 0 : i32
    %c0_i32_0 = arith.constant 0 : i32
    %c0_i32_1 = arith.constant 0 : i32
    return %c0_i32, %c0_i32_0 : i32, i32
  }
  func.func @transform_3(%arg0: i32) -> (i32, i32) {
    %c0_i32 = arith.constant 0 : i32
    %c0_i32_0 = arith.constant 0 : i32
    %c0_i32_1 = arith.constant 0 : i32
    return %c0_i32, %c0_i32_0 : i32, i32
  }
  func.func @transform_4(%arg0: i32) -> (i32, i32, i32) {
    %c0_i32 = arith.constant 0 : i32
    %c0_i32_0 = arith.constant 0 : i32
    %c0_i32_1 = arith.constant 0 : i32
    return %arg0, %c0_i32, %c0_i32_0 : i32, i32, i32
  }
}

</mosaic_0001>

<llo_original>
// kernel: tpu_custom_call.1
$region0: #{tpu_custom_call.1}
  #allocation0 [shape = 'u32[]', space=smem, size = 0x4, offset = 0x4, fixed_abs, tag = 'smem constant byte address 0x4 - core index']
  #allocation1 [shape = 'u32[144,128]{1,0:T(1,128)}', space=vmem, size = 0x12000, scoped, tag = 'internal scratch']
  %s0 = inlined_call_operand.vmem [shape: f32[2,4,256], index: 0, kind: input, shape index: {}]
  %s1 = inlined_call_operand.vmem [shape: f32[256,192], index: 1, kind: input, shape index: {}]
  %s2 = inlined_call_operand.vmem [shape: f32[64,196], index: 2, kind: input, shape index: {}]
  %s3 = inlined_call_operand.vmem [shape: f32[1,196], index: 3, kind: input, shape index: {}]
  %s4 = inlined_call_operand.hbm [shape: f32[2,4,196], index: 4, kind: output, shape index: {}]
  %s5 = sld [smem:[#allocation0]]
  $region26: #{tpu_custom_call.1} parent=0
    _
  %s7 = ssub.s32 1, %s5
  %s8 = scalar_select 0, %s7, %s5
  $region1: #{tpu_custom_call.1} parent=0
    #allocation2 [shape = 'u8[8192]{0}', space=vmem, size = 0x2000, scoped, tag = 'output window, operand 0, single buffered']
    #allocation3 [shape = 's32[1]{0}', space=sflag, size = 0x4, scoped, tag = 'scoped memory for tpu_custom_call.1']
    %9 = vsyncpa [#allocation3], 0
    // Predicated region
    $region2: #{tpu_custom_call.1} parent=1 // pred_check
      _
    $region3: #{tpu_custom_call.1} parent=1 // pred_check_branch
      %11 = sbr.rel (0) target = $region5
    $region4: #{tpu_custom_call.1} parent=1 // pred_region
      _
    $region5: #{tpu_custom_call.1} parent=1 // pred_fallthru
      _
    // Predicated region
    $region6: #{tpu_custom_call.1} parent=1 // pred_check
      _
    $region7: #{tpu_custom_call.1} parent=1 // pred_check_branch
      %13 = sbr.rel (0) target = $region9
    $region8: #{tpu_custom_call.1} parent=1 // pred_region
      _
    $region9: #{tpu_custom_call.1} parent=1 // pred_fallthru
      _
    // Predicated region
    $region10: #{tpu_custom_call.1} parent=1 // pred_check
      _
    $region11: #{tpu_custom_call.1} parent=1 // pred_check_branch
      %15 = sbr.rel (0) target = $region13
    $region12: #{tpu_custom_call.1} parent=1 // pred_region
      _
    $region13: #{tpu_custom_call.1} parent=1 // pred_fallthru
      _
    // Predicated region
    $region14: #{tpu_custom_call.1} parent=1 // pred_check
      _
    $region15: #{tpu_custom_call.1} parent=1 // pred_check_branch
      %17 = sbr.rel (0) target = $region17
    $region16: #{tpu_custom_call.1} parent=1 // pred_region
      _
    $region17: #{tpu_custom_call.1} parent=1 // pred_fallthru
      _
    %v18 = vld [vmem:[%s0] sm:$0xff]
    %v19 = vld [vmem:[%s0 + $0x8] sm:$0xff]
    %v20 = vld [vmem:[%s1] sm:$0xff]
    %v21 = vld [vmem:[%s1 + $0x8] sm:$0xff]
    %v22 = vld [vmem:[%s1 + $0x10] sm:$0xff]
    %v23 = vld [vmem:[%s1 + $0x18] sm:$0xff]
    %v24 = vld [vmem:[%s1 + $0x20] sm:$0xff]
    %v25 = vld [vmem:[%s1 + $0x28] sm:$0xff]
    %v26 = vld [vmem:[%s1 + $0x30] sm:$0xff]
    %v27 = vld [vmem:[%s1 + $0x38] sm:$0xff]
    %v28 = vld [vmem:[%s1 + $0x40] sm:$0xff]
    %v29 = vld [vmem:[%s1 + $0x48] sm:$0xff]
    %v30 = vld [vmem:[%s1 + $0x50] sm:$0xff]
    %v31 = vld [vmem:[%s1 + $0x58] sm:$0xff]
    %v32 = vld [vmem:[%s1 + $0x60] sm:$0xff]
    %v33 = vld [vmem:[%s1 + $0x68] sm:$0xff]
    %v34 = vld [vmem:[%s1 + $0x70] sm:$0xff]
    %v35 = vld [vmem:[%s1 + $0x78] sm:$0xff]
    %v36 = vld [vmem:[%s1 + $0x80] sm:$0xff]
    %v37 = vld [vmem:[%s1 + $0x88] sm:$0xff]
    %v38 = vld [vmem:[%s1 + $0x90] sm:$0xff]
    %v39 = vld [vmem:[%s1 + $0x98] sm:$0xff]
    %v40 = vld [vmem:[%s1 + $0xa0] sm:$0xff]
    %v41 = vld [vmem:[%s1 + $0xa8] sm:$0xff]
    %v42 = vld [vmem:[%s1 + $0xb0] sm:$0xff]
    %v43 = vld [vmem:[%s1 + $0xb8] sm:$0xff]
    %v44 = vld [vmem:[%s1 + $0xc0] sm:$0xff]
    %v45 = vld [vmem:[%s1 + $0xc8] sm:$0xff]
    %v46 = vld [vmem:[%s1 + $0xd0] sm:$0xff]
    %v47 = vld [vmem:[%s1 + $0xd8] sm:$0xff]
    %v48 = vld [vmem:[%s1 + $0xe0] sm:$0xff]
    %v49 = vld [vmem:[%s1 + $0xe8] sm:$0xff]
    %v50 = vld [vmem:[%s1 + $0xf0] sm:$0xff]
    %v51 = vld [vmem:[%s1 + $0xf8] sm:$0xff]
    %v52 = vld [vmem:[%s1 + $0x100] sm:$0xff]
    %v53 = vld [vmem:[%s1 + $0x108] sm:$0xff]
    %v54 = vld [vmem:[%s1 + $0x110] sm:$0xff]
    %v55 = vld [vmem:[%s1 + $0x118] sm:$0xff]
    %v56 = vld [vmem:[%s1 + $0x120] sm:$0xff]
    %v57 = vld [vmem:[%s1 + $0x128] sm:$0xff]
    %v58 = vld [vmem:[%s1 + $0x130] sm:$0xff]
    %v59 = vld [vmem:[%s1 + $0x138] sm:$0xff]
    %v60 = vld [vmem:[%s1 + $0x140] sm:$0xff]
    %v61 = vld [vmem:[%s1 + $0x148] sm:$0xff]
    %v62 = vld [vmem:[%s1 + $0x150] sm:$0xff]
    %v63 = vld [vmem:[%s1 + $0x158] sm:$0xff]
    %v64 = vld [vmem:[%s1 + $0x160] sm:$0xff]
    %v65 = vld [vmem:[%s1 + $0x168] sm:$0xff]
    %v66 = vld [vmem:[%s1 + $0x170] sm:$0xff]
    %v67 = vld [vmem:[%s1 + $0x178] sm:$0xff]
    %v68 = vld [vmem:[%s1 + $0x180] sm:$0xff]
    %v69 = vld [vmem:[%s1 + $0x188] sm:$0xff]
    %v70 = vld [vmem:[%s1 + $0x190] sm:$0xff]
    %v71 = vld [vmem:[%s1 + $0x198] sm:$0xff]
    %v72 = vld [vmem:[%s1 + $0x1a0] sm:$0xff]
    %v73 = vld [vmem:[%s1 + $0x1a8] sm:$0xff]
    %v74 = vld [vmem:[%s1 + $0x1b0] sm:$0xff]
    %v75 = vld [vmem:[%s1 + $0x1b8] sm:$0xff]
    %v76 = vld [vmem:[%s1 + $0x1c0] sm:$0xff]
    %v77 = vld [vmem:[%s1 + $0x1c8] sm:$0xff]
    %v78 = vld [vmem:[%s1 + $0x1d0] sm:$0xff]
    %v79 = vld [vmem:[%s1 + $0x1d8] sm:$0xff]
    %v80 = vld [vmem:[%s1 + $0x1e0] sm:$0xff]
    %v81 = vld [vmem:[%s1 + $0x1e8] sm:$0xff]
    %v82 = vld [vmem:[%s1 + $0x1f0] sm:$0xff]
    %v83 = vld [vmem:[%s1 + $0x1f8] sm:$0xff]
    %v86 = vcombine.low %v18, %v19
    %v87 = vcombine.high %v18, %v19
    %90 = vmatprep.subr.mxu0 %v21
    %91 = vmatpush1.msra.mxu0 %v20
    %92 = vmatprep.subr.mxu0 %v23
    %93 = vmatpush1.msra.mxu0 %v22
    %94 = vmatprep.subr.mxu0 %v25
    %95 = vmatpush1.msra.mxu0 %v24
    %96 = vmatprep.subr.mxu0 %v27
    %97 = vmatpush1.msra.mxu0 %v26
    %98 = vmatprep.subr.mxu0 %v29
    %99 = vmatpush1.msra.mxu0 %v28
    %100 = vmatprep.subr.mxu0 %v31
    %101 = vmatpush1.msra.mxu0 %v30
    %102 = vmatprep.subr.mxu0 %v33
    %103 = vmatpush1.msra.mxu0 %v32
    %104 = vmatprep.subr.mxu0 %v35
    %105 = vmatpush1.msra.mxu0 %v34
    %106 = vmatprep.subr.mxu0 %v37
    %107 = vmatpush1.msra.mxu0 %v36
    %108 = vmatprep.subr.mxu0 %v39
    %109 = vmatpush1.msra.mxu0 %v38
    %110 = vmatprep.subr.mxu0 %v41
    %111 = vmatpush1.msra.mxu0 %v40
    %112 = vmatprep.subr.mxu0 %v43
    %113 = vmatpush1.msra.mxu0 %v42
    %114 = vmatprep.subr.mxu0 %v45
    %115 = vmatpush1.msra.mxu0 %v44
    %116 = vmatprep.subr.mxu0 %v47
    %117 = vmatpush1.msra.mxu0 %v46
    %118 = vmatprep.subr.mxu0 %v49
    %119 = vmatpush1.msra.mxu0 %v48
    %120 = vmatprep.subr.mxu0 %v51
    %121 = vmatpush1.msra.mxu0 %v50
    %122 = vmatprep.subr.mxu0 %v53
    %123 = vmatpush1.msra.mxu0 %v52
    %124 = vmatprep.subr.mxu0 %v55
    %125 = vmatpush1.msra.mxu0 %v54
    %126 = vmatprep.subr.mxu0 %v57
    %127 = vmatpush1.msra.mxu0 %v56
    %128 = vmatprep.subr.mxu0 %v59
    %129 = vmatpush1.msra.mxu0 %v58
    %130 = vmatprep.subr.mxu0 %v61
    %131 = vmatpush1.msra.mxu0 %v60
    %132 = vmatprep.subr.mxu0 %v63
    %133 = vmatpush1.msra.mxu0 %v62
    %134 = vmatprep.subr.mxu0 %v65
    %135 = vmatpush1.msra.mxu0 %v64
    %136 = vmatprep.subr.mxu0 %v67
    %137 = vmatpush1.msra.mxu0 %v66
    %138 = vmatprep.subr.mxu0 %v69
    %139 = vmatpush1.msra.mxu0 %v68
    %140 = vmatprep.subr.mxu0 %v71
    %141 = vmatpush1.msra.mxu0 %v70
    %142 = vmatprep.subr.mxu0 %v73
    %143 = vmatpush1.msra.mxu0 %v72
    %144 = vmatprep.subr.mxu0 %v75
    %145 = vmatpush1.msra.mxu0 %v74
    %146 = vmatprep.subr.mxu0 %v77
    %147 = vmatpush1.msra.mxu0 %v76
    %148 = vmatprep.subr.mxu0 %v79
    %149 = vmatpush1.msra.mxu0 %v78
    %150 = vmatprep.subr.mxu0 %v81
    %151 = vmatpush1.msra.mxu0 %v80
    %152 = vmatprep.subr.mxu0 %v83
    %153 = vmatpush1.msra.mxu0 %v82
    %154 = vmatprep.mubr.f32.mxu0 %v87
    %155 = vmatmul.mubr.f32.gmra.mrb[0].mxu0 %v86
    %v156 = vpop.f32.mrb[0].mxu0
    %v157 = vadd.f32 0.0, %v156
    %v158 = vpop.f32.mrb[0].mxu0
    %v159 = vadd.f32 0.0, %v158
    %160 = vdwg.mxu0
    %162 = vrot.lane.b32.xlu0 %v157, 64
    %v163 = vpop.permute.xlu0 %162
    %vm164 = vcmask 130048
    %v165 = vsel %vm164, %v157, 0
    %v167 = vsel %vm164, %v163, 0
    %169 = vmatprep.subr.mxu0 0.0
    %170 = vmatpush1.xpose.msra.mxu0 %v167
    %171 = vmatprep.subr.mxu0 0.0
    %172 = vmatpush1.xpose.msra.mxu0 0.0
    %173 = vmatprep.subr.mxu0 0.0
    %174 = vmatpush1.xpose.msra.mxu0 0.0
    %175 = vmatprep.subr.mxu0 0.0
    %176 = vmatpush1.xpose.msra.mxu0 0.0
    %177 = vmatprep.subr.mxu0 0.0
    %178 = vmatpush1.xpose.msra.mxu0 0.0
    %179 = vmatprep.subr.mxu0 0.0
    %180 = vmatpush1.xpose.msra.mxu0 0.0
    %181 = vmatprep.subr.mxu0 0.0
    %182 = vmatpush1.xpose.msra.mxu0 0.0
    %183 = vmatprep.subr.mxu0 0.0
    %184 = vmatpush1.xpose.msra.mxu0 0.0
    %185 = vmatprep.subr.mxu0 0.0
    %186 = vmatpush1.xpose.msra.mxu0 0.0
    %187 = vmatprep.subr.mxu0 0.0
    %188 = vmatpush1.xpose.msra.mxu0 0.0
    %189 = vmatprep.subr.mxu0 0.0
    %190 = vmatpush1.xpose.msra.mxu0 0.0
    %191 = vmatprep.subr.mxu0 0.0
    %192 = vmatpush1.xpose.msra.mxu0 0.0
    %193 = vmatprep.subr.mxu0 0.0
    %194 = vmatpush1.xpose.msra.mxu0 0.0
    %195 = vmatprep.subr.mxu0 0.0
    %196 = vmatpush1.xpose.msra.mxu0 0.0
    %197 = vmatprep.subr.mxu0 0.0
    %198 = vmatpush1.xpose.msra.mxu0 0.0
    %199 = vmatprep.subr.mxu0 0.0
    %200 = vmatpush1.xpose.msra.mxu0 0.0
    %201 = vmatprep.subr.mxu0 0.0
    %202 = vmatpush1.xpose.msra.mxu0 0.0
    %203 = vmatprep.subr.mxu0 0.0
    %204 = vmatpush1.xpose.msra.mxu0 0.0
    %205 = vmatprep.subr.mxu0 0.0
    %206 = vmatpush1.xpose.msra.mxu0 0.0
    %207 = vmatprep.subr.mxu0 0.0
    %208 = vmatpush1.xpose.msra.mxu0 0.0
    %209 = vmatprep.subr.mxu0 0.0
    %210 = vmatpush1.xpose.msra.mxu0 0.0
    %211 = vmatprep.subr.mxu0 0.0
    %212 = vmatpush1.xpose.msra.mxu0 0.0
    %213 = vmatprep.subr.mxu0 0.0
    %214 = vmatpush1.xpose.msra.mxu0 0.0
    %215 = vmatprep.subr.mxu0 0.0
    %216 = vmatpush1.xpose.msra.mxu0 0.0
    %217 = vmatprep.subr.mxu0 0.0
    %218 = vmatpush1.xpose.msra.mxu0 0.0
    %219 = vmatprep.subr.mxu0 0.0
    %220 = vmatpush1.xpose.msra.mxu0 0.0
    %221 = vmatprep.subr.mxu0 0.0
    %222 = vmatpush1.xpose.msra.mxu0 0.0
    %223 = vmatprep.subr.mxu0 0.0
    %224 = vmatpush1.xpose.msra.mxu0 0.0
    %225 = vmatprep.subr.mxu0 0.0
    %226 = vmatpush1.xpose.msra.mxu0 0.0
    %227 = vmatprep.subr.mxu0 0.0
    %228 = vmatpush1.xpose.msra.mxu0 0.0
    %229 = vmatprep.subr.mxu0 0.0
    %230 = vmatpush1.xpose.msra.mxu0 0.0
    %231 = vmatprep.subr.mxu0 0.0
    %232 = vmatpush1.xpose.msra.mxu0 0.0
    %233 = vmatprep.mubr.f32.mxu0 0.0
    %234 = vmatmul.mubr.f32.gmra.mrb[0].mxu0 %v165
    %v235 = vpop.f32.mrb[0].mxu0
    %v236 = vadd.f32 0.0, %v235
    %v237 = vpop.f32.mrb[0].mxu0
    %238 = vdwg.mxu0
    %vm239 = vcmask 27648
    %v240 = vsel %vm239, %v236, -inf
    %241 = vmax.xlane.f32.xlu0 %v240
    %v242 = vpop.xlane.xlu0 %241
    %v243 = vsub.f32 %v236, %v242
    %v244 = vmul.f32 %v243, 1.442695
    %v245 = vpow.pop %v244
    %v246 = vsel %vm239, %v245, 0.0
    %247 = vadd.xlane.f32.xlu0 %v246
    %v248 = vpop.xlane.xlu0 %247
    %v249 = vrcp.pop %v248
    %v250 = vmul.f32 %v245, %v249
    %vm251 = vcmask 31744
    %v253 = vsel %vm251, %v250, 0
    %vm255 = vcmask 1043456
    %v257 = vsel %vm255, %v159, 0
    %259 = vmatprep.subr.mxu0 0.0
    %260 = vmatpush1.msra.mxu0 %v257
    %261 = vmatprep.subr.mxu0 0.0
    %262 = vmatpush1.msra.mxu0 0.0
    %263 = vmatprep.subr.mxu0 0.0
    %264 = vmatpush1.msra.mxu0 0.0
    %265 = vmatprep.subr.mxu0 0.0
    %266 = vmatpush1.msra.mxu0 0.0
    %267 = vmatprep.subr.mxu0 0.0
    %268 = vmatpush1.msra.mxu0 0.0
    %269 = vmatprep.subr.mxu0 0.0
    %270 = vmatpush1.msra.mxu0 0.0
    %271 = vmatprep.subr.mxu0 0.0
    %272 = vmatpush1.msra.mxu0 0.0
    %273 = vmatprep.subr.mxu0 0.0
    %274 = vmatpush1.msra.mxu0 0.0
    %275 = vmatprep.subr.mxu0 0.0
    %276 = vmatpush1.msra.mxu0 0.0
    %277 = vmatprep.subr.mxu0 0.0
    %278 = vmatpush1.msra.mxu0 0.0
    %279 = vmatprep.subr.mxu0 0.0
    %280 = vmatpush1.msra.mxu0 0.0
    %281 = vmatprep.subr.mxu0 0.0
    %282 = vmatpush1.msra.mxu0 0.0
    %283 = vmatprep.subr.mxu0 0.0
    %284 = vmatpush1.msra.mxu0 0.0
    %285 = vmatprep.subr.mxu0 0.0
    %286 = vmatpush1.msra.mxu0 0.0
    %287 = vmatprep.subr.mxu0 0.0
    %288 = vmatpush1.msra.mxu0 0.0
    %289 = vmatprep.subr.mxu0 0.0
    %290 = vmatpush1.msra.mxu0 0.0
    %291 = vmatprep.subr.mxu0 0.0
    %292 = vmatpush1.msra.mxu0 0.0
    %293 = vmatprep.subr.mxu0 0.0
    %294 = vmatpush1.msra.mxu0 0.0
    %295 = vmatprep.subr.mxu0 0.0
    %296 = vmatpush1.msra.mxu0 0.0
    %297 = vmatprep.subr.mxu0 0.0
    %298 = vmatpush1.msra.mxu0 0.0
    %299 = vmatprep.subr.mxu0 0.0
    %300 = vmatpush1.msra.mxu0 0.0
    %301 = vmatprep.subr.mxu0 0.0
    %302 = vmatpush1.msra.mxu0 0.0
    %303 = vmatprep.subr.mxu0 0.0
    %304 = vmatpush1.msra.mxu0 0.0
    %305 = vmatprep.subr.mxu0 0.0
    %306 = vmatpush1.msra.mxu0 0.0
    %307 = vmatprep.subr.mxu0 0.0
    %308 = vmatpush1.msra.mxu0 0.0
    %309 = vmatprep.subr.mxu0 0.0
    %310 = vmatpush1.msra.mxu0 0.0
    %311 = vmatprep.subr.mxu0 0.0
    %312 = vmatpush1.msra.mxu0 0.0
    %313 = vmatprep.subr.mxu0 0.0
    %314 = vmatpush1.msra.mxu0 0.0
    %315 = vmatprep.subr.mxu0 0.0
    %316 = vmatpush1.msra.mxu0 0.0
    %317 = vmatprep.subr.mxu0 0.0
    %318 = vmatpush1.msra.mxu0 0.0
    %319 = vmatprep.subr.mxu0 0.0
    %320 = vmatpush1.msra.mxu0 0.0
    %321 = vmatprep.subr.mxu0 0.0
    %322 = vmatpush1.msra.mxu0 0.0
    %323 = vmatprep.mubr.f32.mxu0 0.0
    %324 = vmatmul.mubr.f32.gmra.mrb[0].mxu0 %v253
    %v325 = vpop.f32.mrb[0].mxu0
    %v326 = vadd.f32 0.0, %v325
    %v327 = vpop.f32.mrb[0].mxu0
    %328 = vdwg.mxu0
    %329 = vrot.lane.b32.xlu0 %v157, 112
    %v330 = vpop.permute.xlu0 %329
    %331 = vrot.lane.b32.xlu0 %v157, 48
    %v332 = vpop.permute.xlu0 %331
    %v333 = vsel %vm164, %v330, 0
    %v335 = vsel %vm164, %v332, 0
    %337 = vmatprep.subr.mxu0 0.0
    %338 = vmatpush1.xpose.msra.mxu0 %v335
    %339 = vmatprep.subr.mxu0 0.0
    %340 = vmatpush1.xpose.msra.mxu0 0.0
    %341 = vmatprep.subr.mxu0 0.0
    %342 = vmatpush1.xpose.msra.mxu0 0.0
    %343 = vmatprep.subr.mxu0 0.0
    %344 = vmatpush1.xpose.msra.mxu0 0.0
    %345 = vmatprep.subr.mxu0 0.0
    %346 = vmatpush1.xpose.msra.mxu0 0.0
    %347 = vmatprep.subr.mxu0 0.0
    %348 = vmatpush1.xpose.msra.mxu0 0.0
    %349 = vmatprep.subr.mxu0 0.0
    %350 = vmatpush1.xpose.msra.mxu0 0.0
    %351 = vmatprep.subr.mxu0 0.0
    %352 = vmatpush1.xpose.msra.mxu0 0.0
    %353 = vmatprep.subr.mxu0 0.0
    %354 = vmatpush1.xpose.msra.mxu0 0.0
    %355 = vmatprep.subr.mxu0 0.0
    %356 = vmatpush1.xpose.msra.mxu0 0.0
    %357 = vmatprep.subr.mxu0 0.0
    %358 = vmatpush1.xpose.msra.mxu0 0.0
    %359 = vmatprep.subr.mxu0 0.0
    %360 = vmatpush1.xpose.msra.mxu0 0.0
    %361 = vmatprep.subr.mxu0 0.0
    %362 = vmatpush1.xpose.msra.mxu0 0.0
    %363 = vmatprep.subr.mxu0 0.0
    %364 = vmatpush1.xpose.msra.mxu0 0.0
    %365 = vmatprep.subr.mxu0 0.0
    %366 = vmatpush1.xpose.msra.mxu0 0.0
    %367 = vmatprep.subr.mxu0 0.0
    %368 = vmatpush1.xpose.msra.mxu0 0.0
    %369 = vmatprep.subr.mxu0 0.0
    %370 = vmatpush1.xpose.msra.mxu0 0.0
    %371 = vmatprep.subr.mxu0 0.0
    %372 = vmatpush1.xpose.msra.mxu0 0.0
    %373 = vmatprep.subr.mxu0 0.0
    %374 = vmatpush1.xpose.msra.mxu0 0.0
    %375 = vmatprep.subr.mxu0 0.0
    %376 = vmatpush1.xpose.msra.mxu0 0.0
    %377 = vmatprep.subr.mxu0 0.0
    %378 = vmatpush1.xpose.msra.mxu0 0.0
    %379 = vmatprep.subr.mxu0 0.0
    %380 = vmatpush1.xpose.msra.mxu0 0.0
    %381 = vmatprep.subr.mxu0 0.0
    %382 = vmatpush1.xpose.msra.mxu0 0.0
    %383 = vmatprep.subr.mxu0 0.0
    %384 = vmatpush1.xpose.msra.mxu0 0.0
    %385 = vmatprep.subr.mxu0 0.0
    %386 = vmatpush1.xpose.msra.mxu0 0.0
    %387 = vmatprep.subr.mxu0 0.0
    %388 = vmatpush1.xpose.msra.mxu0 0.0
    %389 = vmatprep.subr.mxu0 0.0
    %390 = vmatpush1.xpose.msra.mxu0 0.0
    %391 = vmatprep.subr.mxu0 0.0
    %392 = vmatpush1.xpose.msra.mxu0 0.0
    %393 = vmatprep.subr.mxu0 0.0
    %394 = vmatpush1.xpose.msra.mxu0 0.0
    %395 = vmatprep.subr.mxu0 0.0
    %396 = vmatpush1.xpose.msra.mxu0 0.0
    %397 = vmatprep.subr.mxu0 0.0
    %398 = vmatpush1.xpose.msra.mxu0 0.0
    %399 = vmatprep.subr.mxu0 0.0
    %400 = vmatpush1.xpose.msra.mxu0 0.0
    %401 = vmatprep.mubr.f32.mxu0 0.0
    %402 = vmatmul.mubr.f32.gmra.mrb[0].mxu0 %v333
    %v403 = vpop.f32.mrb[0].mxu0
    %v404 = vadd.f32 0.0, %v403
    %v405 = vpop.f32.mrb[0].mxu0
    %406 = vdwg.mxu0
    %v407 = vsel %vm239, %v404, -inf
    %408 = vmax.xlane.f32.xlu0 %v407
    %v409 = vpop.xlane.xlu0 %408
    %v410 = vsub.f32 %v404, %v409
    %v411 = vmul.f32 %v410, 1.442695
    %v412 = vpow.pop %v411
    %v413 = vsel %vm239, %v412, 0.0
    %414 = vadd.xlane.f32.xlu0 %v413
    %v415 = vpop.xlane.xlu0 %414
    %v416 = vrcp.pop %v415
    %v417 = vmul.f32 %v412, %v416
    %418 = vrot.lane.b32.xlu0 %v159, 112
    %v419 = vpop.permute.xlu0 %418
    %v421 = vsel %vm251, %v417, 0
    %v423 = vsel %vm255, %v419, 0
    %425 = vmatprep.subr.mxu0 0.0
    %426 = vmatpush1.msra.mxu0 %v423
    %427 = vmatprep.subr.mxu0 0.0
    %428 = vmatpush1.msra.mxu0 0.0
    %429 = vmatprep.subr.mxu0 0.0
    %430 = vmatpush1.msra.mxu0 0.0
    %431 = vmatprep.subr.mxu0 0.0
    %432 = vmatpush1.msra.mxu0 0.0
    %433 = vmatprep.subr.mxu0 0.0
    %434 = vmatpush1.msra.mxu0 0.0
    %435 = vmatprep.subr.mxu0 0.0
    %436 = vmatpush1.msra.mxu0 0.0
    %437 = vmatprep.subr.mxu0 0.0
    %438 = vmatpush1.msra.mxu0 0.0
    %439 = vmatprep.subr.mxu0 0.0
    %440 = vmatpush1.msra.mxu0 0.0
    %441 = vmatprep.subr.mxu0 0.0
    %442 = vmatpush1.msra.mxu0 0.0
    %443 = vmatprep.subr.mxu0 0.0
    %444 = vmatpush1.msra.mxu0 0.0
    %445 = vmatprep.subr.mxu0 0.0
    %446 = vmatpush1.msra.mxu0 0.0
    %447 = vmatprep.subr.mxu0 0.0
    %448 = vmatpush1.msra.mxu0 0.0
    %449 = vmatprep.subr.mxu0 0.0
    %450 = vmatpush1.msra.mxu0 0.0
    %451 = vmatprep.subr.mxu0 0.0
    %452 = vmatpush1.msra.mxu0 0.0
    %453 = vmatprep.subr.mxu0 0.0
    %454 = vmatpush1.msra.mxu0 0.0
    %455 = vmatprep.subr.mxu0 0.0
    %456 = vmatpush1.msra.mxu0 0.0
    %457 = vmatprep.subr.mxu0 0.0
    %458 = vmatpush1.msra.mxu0 0.0
    %459 = vmatprep.subr.mxu0 0.0
    %460 = vmatpush1.msra.mxu0 0.0
    %461 = vmatprep.subr.mxu0 0.0
    %462 = vmatpush1.msra.mxu0 0.0
    %463 = vmatprep.subr.mxu0 0.0
    %464 = vmatpush1.msra.mxu0 0.0
    %465 = vmatprep.subr.mxu0 0.0
    %466 = vmatpush1.msra.mxu0 0.0
    %467 = vmatprep.subr.mxu0 0.0
    %468 = vmatpush1.msra.mxu0 0.0
    %469 = vmatprep.subr.mxu0 0.0
    %470 = vmatpush1.msra.mxu0 0.0
    %471 = vmatprep.subr.mxu0 0.0
    %472 = vmatpush1.msra.mxu0 0.0
    %473 = vmatprep.subr.mxu0 0.0
    %474 = vmatpush1.msra.mxu0 0.0
    %475 = vmatprep.subr.mxu0 0.0
    %476 = vmatpush1.msra.mxu0 0.0
    %477 = vmatprep.subr.mxu0 0.0
    %478 = vmatpush1.msra.mxu0 0.0
    %479 = vmatprep.subr.mxu0 0.0
    %480 = vmatpush1.msra.mxu0 0.0
    %481 = vmatprep.subr.mxu0 0.0
    %482 = vmatpush1.msra.mxu0 0.0
    %483 = vmatprep.subr.mxu0 0.0
    %484 = vmatpush1.msra.mxu0 0.0
    %485 = vmatprep.subr.mxu0 0.0
    %486 = vmatpush1.msra.mxu0 0.0
    %487 = vmatprep.subr.mxu0 0.0
    %488 = vmatpush1.msra.mxu0 0.0
    %489 = vmatprep.mubr.f32.mxu0 0.0
    %490 = vmatmul.mubr.f32.gmra.mrb[0].mxu0 %v421
    %v491 = vpop.f32.mrb[0].mxu0
    %v492 = vadd.f32 0.0, %v491
    %v493 = vpop.f32.mrb[0].mxu0
    %494 = vdwg.mxu0
    %495 = vrot.lane.b32.xlu0 %v157, 96
    %v496 = vpop.permute.xlu0 %495
    %497 = vrot.lane.b32.xlu0 %v157, 32
    %v498 = vpop.permute.xlu0 %497
    %v499 = vsel %vm164, %v496, 0
    %v501 = vsel %vm164, %v498, 0
    %503 = vmatprep.subr.mxu0 0.0
    %504 = vmatpush1.xpose.msra.mxu0 %v501
    %505 = vmatprep.subr.mxu0 0.0
    %506 = vmatpush1.xpose.msra.mxu0 0.0
    %507 = vmatprep.subr.mxu0 0.0
    %508 = vmatpush1.xpose.msra.mxu0 0.0
    %509 = vmatprep.subr.mxu0 0.0
    %510 = vmatpush1.xpose.msra.mxu0 0.0
    %511 = vmatprep.subr.mxu0 0.0
    %512 = vmatpush1.xpose.msra.mxu0 0.0
    %513 = vmatprep.subr.mxu0 0.0
    %514 = vmatpush1.xpose.msra.mxu0 0.0
    %515 = vmatprep.subr.mxu0 0.0
    %516 = vmatpush1.xpose.msra.mxu0 0.0
    %517 = vmatprep.subr.mxu0 0.0
    %518 = vmatpush1.xpose.msra.mxu0 0.0
    %519 = vmatprep.subr.mxu0 0.0
    %520 = vmatpush1.xpose.msra.mxu0 0.0
    %521 = vmatprep.subr.mxu0 0.0
    %522 = vmatpush1.xpose.msra.mxu0 0.0
    %523 = vmatprep.subr.mxu0 0.0
    %524 = vmatpush1.xpose.msra.mxu0 0.0
    %525 = vmatprep.subr.mxu0 0.0
    %526 = vmatpush1.xpose.msra.mxu0 0.0
    %527 = vmatprep.subr.mxu0 0.0
    %528 = vmatpush1.xpose.msra.mxu0 0.0
    %529 = vmatprep.subr.mxu0 0.0
    %530 = vmatpush1.xpose.msra.mxu0 0.0
    %531 = vmatprep.subr.mxu0 0.0
    %532 = vmatpush1.xpose.msra.mxu0 0.0
    %533 = vmatprep.subr.mxu0 0.0
    %534 = vmatpush1.xpose.msra.mxu0 0.0
    %535 = vmatprep.subr.mxu0 0.0
    %536 = vmatpush1.xpose.msra.mxu0 0.0
    %537 = vmatprep.subr.mxu0 0.0
    %538 = vmatpush1.xpose.msra.mxu0 0.0
    %539 = vmatprep.subr.mxu0 0.0
    %540 = vmatpush1.xpose.msra.mxu0 0.0
    %541 = vmatprep.subr.mxu0 0.0
    %542 = vmatpush1.xpose.msra.mxu0 0.0
    %543 = vmatprep.subr.mxu0 0.0
    %544 = vmatpush1.xpose.msra.mxu0 0.0
    %545 = vmatprep.subr.mxu0 0.0
    %546 = vmatpush1.xpose.msra.mxu0 0.0
    %547 = vmatprep.subr.mxu0 0.0
    %548 = vmatpush1.xpose.msra.mxu0 0.0
    %549 = vmatprep.subr.mxu0 0.0
    %550 = vmatpush1.xpose.msra.mxu0 0.0
    %551 = vmatprep.subr.mxu0 0.0
    %552 = vmatpush1.xpose.msra.mxu0 0.0
    %553 = vmatprep.subr.mxu0 0.0
    %554 = vmatpush1.xpose.msra.mxu0 0.0
    %555 = vmatprep.subr.mxu0 0.0
    %556 = vmatpush1.xpose.msra.mxu0 0.0
    %557 = vmatprep.subr.mxu0 0.0
    %558 = vmatpush1.xpose.msra.mxu0 0.0
    %559 = vmatprep.subr.mxu0 0.0
    %560 = vmatpush1.xpose.msra.mxu0 0.0
    %561 = vmatprep.subr.mxu0 0.0
    %562 = vmatpush1.xpose.msra.mxu0 0.0
    %563 = vmatprep.subr.mxu0 0.0
    %564 = vmatpush1.xpose.msra.mxu0 0.0
    %565 = vmatprep.subr.mxu0 0.0
    %566 = vmatpush1.xpose.msra.mxu0 0.0
    %567 = vmatprep.mubr.f32.mxu0 0.0
    %568 = vmatmul.mubr.f32.gmra.mrb[0].mxu0 %v499
    %v569 = vpop.f32.mrb[0].mxu0
    %v570 = vadd.f32 0.0, %v569
    %v571 = vpop.f32.mrb[0].mxu0
    %572 = vdwg.mxu0
    %v573 = vsel %vm239, %v570, -inf
    %574 = vmax.xlane.f32.xlu0 %v573
    %v575 = vpop.xlane.xlu0 %574
    %v576 = vsub.f32 %v570, %v575
    %v577 = vmul.f32 %v576, 1.442695
    %v578 = vpow.pop %v577
    %v579 = vsel %vm239, %v578, 0.0
    %580 = vadd.xlane.f32.xlu0 %v579
    %v581 = vpop.xlane.xlu0 %580
    %v582 = vrcp.pop %v581
    %v583 = vmul.f32 %v578, %v582
    %584 = vrot.lane.b32.xlu0 %v159, 96
    %v585 = vpop.permute.xlu0 %584
    %v587 = vsel %vm251, %v583, 0
    %v589 = vsel %vm255, %v585, 0
    %591 = vmatprep.subr.mxu0 0.0
    %592 = vmatpush1.msra.mxu0 %v589
    %593 = vmatprep.subr.mxu0 0.0
    %594 = vmatpush1.msra.mxu0 0.0
    %595 = vmatprep.subr.mxu0 0.0
    %596 = vmatpush1.msra.mxu0 0.0
    %597 = vmatprep.subr.mxu0 0.0
    %598 = vmatpush1.msra.mxu0 0.0
    %599 = vmatprep.subr.mxu0 0.0
    %600 = vmatpush1.msra.mxu0 0.0
    %601 = vmatprep.subr.mxu0 0.0
    %602 = vmatpush1.msra.mxu0 0.0
    %603 = vmatprep.subr.mxu0 0.0
    %604 = vmatpush1.msra.mxu0 0.0
    %605 = vmatprep.subr.mxu0 0.0
    %606 = vmatpush1.msra.mxu0 0.0
    %607 = vmatprep.subr.mxu0 0.0
    %608 = vmatpush1.msra.mxu0 0.0
    %609 = vmatprep.subr.mxu0 0.0
    %610 = vmatpush1.msra.mxu0 0.0
    %611 = vmatprep.subr.mxu0 0.0
    %612 = vmatpush1.msra.mxu0 0.0
    %613 = vmatprep.subr.mxu0 0.0
    %614 = vmatpush1.msra.mxu0 0.0
    %615 = vmatprep.subr.mxu0 0.0
    %616 = vmatpush1.msra.mxu0 0.0
    %617 = vmatprep.subr.mxu0 0.0
    %618 = vmatpush1.msra.mxu0 0.0
    %619 = vmatprep.subr.mxu0 0.0
    %620 = vmatpush1.msra.mxu0 0.0
    %621 = vmatprep.subr.mxu0 0.0
    %622 = vmatpush1.msra.mxu0 0.0
    %623 = vmatprep.subr.mxu0 0.0
    %624 = vmatpush1.msra.mxu0 0.0
    %625 = vmatprep.subr.mxu0 0.0
    %626 = vmatpush1.msra.mxu0 0.0
    %627 = vmatprep.subr.mxu0 0.0
    %628 = vmatpush1.msra.mxu0 0.0
    %629 = vmatprep.subr.mxu0 0.0
    %630 = vmatpush1.msra.mxu0 0.0
    %631 = vmatprep.subr.mxu0 0.0
    %632 = vmatpush1.msra.mxu0 0.0
    %633 = vmatprep.subr.mxu0 0.0
    %634 = vmatpush1.msra.mxu0 0.0
    %635 = vmatprep.subr.mxu0 0.0
    %636 = vmatpush1.msra.mxu0 0.0
    %637 = vmatprep.subr.mxu0 0.0
    %638 = vmatpush1.msra.mxu0 0.0
    %639 = vmatprep.subr.mxu0 0.0
    %640 = vmatpush1.msra.mxu0 0.0
    %641 = vmatprep.subr.mxu0 0.0
    %642 = vmatpush1.msra.mxu0 0.0
    %643 = vmatprep.subr.mxu0 0.0
    %644 = vmatpush1.msra.mxu0 0.0
    %645 = vmatprep.subr.mxu0 0.0
    %646 = vmatpush1.msra.mxu0 0.0
    %647 = vmatprep.subr.mxu0 0.0
    %648 = vmatpush1.msra.mxu0 0.0
    %649 = vmatprep.subr.mxu0 0.0
    %650 = vmatpush1.msra.mxu0 0.0
    %651 = vmatprep.subr.mxu0 0.0
    %652 = vmatpush1.msra.mxu0 0.0
    %653 = vmatprep.subr.mxu0 0.0
    %654 = vmatpush1.msra.mxu0 0.0
    %655 = vmatprep.mubr.f32.mxu0 0.0
    %656 = vmatmul.mubr.f32.gmra.mrb[0].mxu0 %v587
    %v657 = vpop.f32.mrb[0].mxu0
    %v658 = vadd.f32 0.0, %v657
    %v659 = vpop.f32.mrb[0].mxu0
    %660 = vdwg.mxu0
    %661 = vrot.lane.b32.xlu0 %v157, 80
    %v662 = vpop.permute.xlu0 %661
    %663 = vrot.lane.b32.xlu0 %v157, 16
    %v664 = vpop.permute.xlu0 %663
    %v665 = vsel %vm164, %v662, 0
    %v667 = vsel %vm164, %v664, 0
    %669 = vmatprep.subr.mxu0 0.0
    %670 = vmatpush1.xpose.msra.mxu0 %v667
    %671 = vmatprep.subr.mxu0 0.0
    %672 = vmatpush1.xpose.msra.mxu0 0.0
    %673 = vmatprep.subr.mxu0 0.0
    %674 = vmatpush1.xpose.msra.mxu0 0.0
    %675 = vmatprep.subr.mxu0 0.0
    %676 = vmatpush1.xpose.msra.mxu0 0.0
    %677 = vmatprep.subr.mxu0 0.0
    %678 = vmatpush1.xpose.msra.mxu0 0.0
    %679 = vmatprep.subr.mxu0 0.0
    %680 = vmatpush1.xpose.msra.mxu0 0.0
    %681 = vmatprep.subr.mxu0 0.0
    %682 = vmatpush1.xpose.msra.mxu0 0.0
    %683 = vmatprep.subr.mxu0 0.0
    %684 = vmatpush1.xpose.msra.mxu0 0.0
    %685 = vmatprep.subr.mxu0 0.0
    %686 = vmatpush1.xpose.msra.mxu0 0.0
    %687 = vmatprep.subr.mxu0 0.0
    %688 = vmatpush1.xpose.msra.mxu0 0.0
    %689 = vmatprep.subr.mxu0 0.0
    %690 = vmatpush1.xpose.msra.mxu0 0.0
    %691 = vmatprep.subr.mxu0 0.0
    %692 = vmatpush1.xpose.msra.mxu0 0.0
    %693 = vmatprep.subr.mxu0 0.0
    %694 = vmatpush1.xpose.msra.mxu0 0.0
    %695 = vmatprep.subr.mxu0 0.0
    %696 = vmatpush1.xpose.msra.mxu0 0.0
    %697 = vmatprep.subr.mxu0 0.0
    %698 = vmatpush1.xpose.msra.mxu0 0.0
    %699 = vmatprep.subr.mxu0 0.0
    %700 = vmatpush1.xpose.msra.mxu0 0.0
    %701 = vmatprep.subr.mxu0 0.0
    %702 = vmatpush1.xpose.msra.mxu0 0.0
    %703 = vmatprep.subr.mxu0 0.0
    %704 = vmatpush1.xpose.msra.mxu0 0.0
    %705 = vmatprep.subr.mxu0 0.0
    %706 = vmatpush1.xpose.msra.mxu0 0.0
    %707 = vmatprep.subr.mxu0 0.0
    %708 = vmatpush1.xpose.msra.mxu0 0.0
    %709 = vmatprep.subr.mxu0 0.0
    %710 = vmatpush1.xpose.msra.mxu0 0.0
    %711 = vmatprep.subr.mxu0 0.0
    %712 = vmatpush1.xpose.msra.mxu0 0.0
    %713 = vmatprep.subr.mxu0 0.0
    %714 = vmatpush1.xpose.msra.mxu0 0.0
    %715 = vmatprep.subr.mxu0 0.0
    %716 = vmatpush1.xpose.msra.mxu0 0.0
    %717 = vmatprep.subr.mxu0 0.0
    %718 = vmatpush1.xpose.msra.mxu0 0.0
    %719 = vmatprep.subr.mxu0 0.0
    %720 = vmatpush1.xpose.msra.mxu0 0.0
    %721 = vmatprep.subr.mxu0 0.0
    %722 = vmatpush1.xpose.msra.mxu0 0.0
    %723 = vmatprep.subr.mxu0 0.0
    %724 = vmatpush1.xpose.msra.mxu0 0.0
    %725 = vmatprep.subr.mxu0 0.0
    %726 = vmatpush1.xpose.msra.mxu0 0.0
    %727 = vmatprep.subr.mxu0 0.0
    %728 = vmatpush1.xpose.msra.mxu0 0.0
    %729 = vmatprep.subr.mxu0 0.0
    %730 = vmatpush1.xpose.msra.mxu0 0.0
    %731 = vmatprep.subr.mxu0 0.0
    %732 = vmatpush1.xpose.msra.mxu0 0.0
    %733 = vmatprep.mubr.f32.mxu0 0.0
    %734 = vmatmul.mubr.f32.gmra.mrb[0].mxu0 %v665
    %v735 = vpop.f32.mrb[0].mxu0
    %v736 = vadd.f32 0.0, %v735
    %v737 = vpop.f32.mrb[0].mxu0
    %738 = vdwg.mxu0
    %v739 = vsel %vm239, %v736, -inf
    %740 = vmax.xlane.f32.xlu0 %v739
    %v741 = vpop.xlane.xlu0 %740
    %v742 = vsub.f32 %v736, %v741
    %v743 = vmul.f32 %v742, 1.442695
    %v744 = vpow.pop %v743
    %v745 = vsel %vm239, %v744, 0.0
    %746 = vadd.xlane.f32.xlu0 %v745
    %v747 = vpop.xlane.xlu0 %746
    %v748 = vrcp.pop %v747
    %v749 = vmul.f32 %v744, %v748
    %750 = vrot.lane.b32.xlu0 %v159, 80
    %v751 = vpop.permute.xlu0 %750
    %v753 = vsel %vm251, %v749, 0
    %v755 = vsel %vm255, %v751, 0
    %757 = vmatprep.subr.mxu0 0.0
    %758 = vmatpush1.msra.mxu0 %v755
    %759 = vmatprep.subr.mxu0 0.0
    %760 = vmatpush1.msra.mxu0 0.0
    %761 = vmatprep.subr.mxu0 0.0
    %762 = vmatpush1.msra.mxu0 0.0
    %763 = vmatprep.subr.mxu0 0.0
    %764 = vmatpush1.msra.mxu0 0.0
    %765 = vmatprep.subr.mxu0 0.0
    %766 = vmatpush1.msra.mxu0 0.0
    %767 = vmatprep.subr.mxu0 0.0
    %768 = vmatpush1.msra.mxu0 0.0
    %769 = vmatprep.subr.mxu0 0.0
    %770 = vmatpush1.msra.mxu0 0.0
    %771 = vmatprep.subr.mxu0 0.0
    %772 = vmatpush1.msra.mxu0 0.0
    %773 = vmatprep.subr.mxu0 0.0
    %774 = vmatpush1.msra.mxu0 0.0
    %775 = vmatprep.subr.mxu0 0.0
    %776 = vmatpush1.msra.mxu0 0.0
    %777 = vmatprep.subr.mxu0 0.0
    %778 = vmatpush1.msra.mxu0 0.0
    %779 = vmatprep.subr.mxu0 0.0
    %780 = vmatpush1.msra.mxu0 0.0
    %781 = vmatprep.subr.mxu0 0.0
    %782 = vmatpush1.msra.mxu0 0.0
    %783 = vmatprep.subr.mxu0 0.0
    %784 = vmatpush1.msra.mxu0 0.0
    %785 = vmatprep.subr.mxu0 0.0
    %786 = vmatpush1.msra.mxu0 0.0
    %787 = vmatprep.subr.mxu0 0.0
    %788 = vmatpush1.msra.mxu0 0.0
    %789 = vmatprep.subr.mxu0 0.0
    %790 = vmatpush1.msra.mxu0 0.0
    %791 = vmatprep.subr.mxu0 0.0
    %792 = vmatpush1.msra.mxu0 0.0
    %793 = vmatprep.subr.mxu0 0.0
    %794 = vmatpush1.msra.mxu0 0.0
    %795 = vmatprep.subr.mxu0 0.0
    %796 = vmatpush1.msra.mxu0 0.0
    %797 = vmatprep.subr.mxu0 0.0
    %798 = vmatpush1.msra.mxu0 0.0
    %799 = vmatprep.subr.mxu0 0.0
    %800 = vmatpush1.msra.mxu0 0.0
    %801 = vmatprep.subr.mxu0 0.0
    %802 = vmatpush1.msra.mxu0 0.0
    %803 = vmatprep.subr.mxu0 0.0
    %804 = vmatpush1.msra.mxu0 0.0
    %805 = vmatprep.subr.mxu0 0.0
    %806 = vmatpush1.msra.mxu0 0.0
    %807 = vmatprep.subr.mxu0 0.0
    %808 = vmatpush1.msra.mxu0 0.0
    %809 = vmatprep.subr.mxu0 0.0
    %810 = vmatpush1.msra.mxu0 0.0
    %811 = vmatprep.subr.mxu0 0.0
    %812 = vmatpush1.msra.mxu0 0.0
    %813 = vmatprep.subr.mxu0 0.0
    %814 = vmatpush1.msra.mxu0 0.0
    %815 = vmatprep.subr.mxu0 0.0
    %816 = vmatpush1.msra.mxu0 0.0
    %817 = vmatprep.subr.mxu0 0.0
    %818 = vmatpush1.msra.mxu0 0.0
    %819 = vmatprep.subr.mxu0 0.0
    %820 = vmatpush1.msra.mxu0 0.0
    %821 = vmatprep.mubr.f32.mxu0 0.0
    %822 = vmatmul.mubr.f32.gmra.mrb[0].mxu0 %v753
    %v823 = vpop.f32.mrb[0].mxu0
    %v824 = vadd.f32 0.0, %v823
    %v825 = vpop.f32.mrb[0].mxu0
    %826 = vdwg.mxu0
    %828 = vrot.lane.b32.xlu0 %v492, 16
    %v829 = vpop.permute.xlu0 %828
    %832 = vrot.lane.b32.xlu0 %v658, 32
    %v833 = vpop.permute.xlu0 %832
    %836 = vrot.lane.b32.xlu0 %v824, 48
    %v837 = vpop.permute.xlu0 %836
    %v839 = vsel %vm164, %v326, %v829
    %vm840 = vcmask 261120
    %v841 = vsel %vm840, %v839, %v833
    %vm842 = vcmask 392192
    %v843 = vsel %vm842, %v841, %v837
    %v844 = vrot.slane %v157, 4
    %845 = vrot.lane.b32.xlu0 %v844, 64
    %v846 = vpop.permute.xlu0 %845
    %v847 = vsel %vm164, %v844, 0
    %v849 = vsel %vm164, %v846, 0
    %851 = vmatprep.subr.mxu0 0.0
    %852 = vmatpush1.xpose.msra.mxu0 %v849
    %853 = vmatprep.subr.mxu0 0.0
    %854 = vmatpush1.xpose.msra.mxu0 0.0
    %855 = vmatprep.subr.mxu0 0.0
    %856 = vmatpush1.xpose.msra.mxu0 0.0
    %857 = vmatprep.subr.mxu0 0.0
    %858 = vmatpush1.xpose.msra.mxu0 0.0
    %859 = vmatprep.subr.mxu0 0.0
    %860 = vmatpush1.xpose.msra.mxu0 0.0
    %861 = vmatprep.subr.mxu0 0.0
    %862 = vmatpush1.xpose.msra.mxu0 0.0
    %863 = vmatprep.subr.mxu0 0.0
    %864 = vmatpush1.xpose.msra.mxu0 0.0
    %865 = vmatprep.subr.mxu0 0.0
    %866 = vmatpush1.xpose.msra.mxu0 0.0
    %867 = vmatprep.subr.mxu0 0.0
    %868 = vmatpush1.xpose.msra.mxu0 0.0
    %869 = vmatprep.subr.mxu0 0.0
    %870 = vmatpush1.xpose.msra.mxu0 0.0
    %871 = vmatprep.subr.mxu0 0.0
    %872 = vmatpush1.xpose.msra.mxu0 0.0
    %873 = vmatprep.subr.mxu0 0.0
    %874 = vmatpush1.xpose.msra.mxu0 0.0
    %875 = vmatprep.subr.mxu0 0.0
    %876 = vmatpush1.xpose.msra.mxu0 0.0
    %877 = vmatprep.subr.mxu0 0.0
    %878 = vmatpush1.xpose.msra.mxu0 0.0
    %879 = vmatprep.subr.mxu0 0.0
    %880 = vmatpush1.xpose.msra.mxu0 0.0
    %881 = vmatprep.subr.mxu0 0.0
    %882 = vmatpush1.xpose.msra.mxu0 0.0
    %883 = vmatprep.subr.mxu0 0.0
    %884 = vmatpush1.xpose.msra.mxu0 0.0
    %885 = vmatprep.subr.mxu0 0.0
    %886 = vmatpush1.xpose.msra.mxu0 0.0
    %887 = vmatprep.subr.mxu0 0.0
    %888 = vmatpush1.xpose.msra.mxu0 0.0
    %889 = vmatprep.subr.mxu0 0.0
    %890 = vmatpush1.xpose.msra.mxu0 0.0
    %891 = vmatprep.subr.mxu0 0.0
    %892 = vmatpush1.xpose.msra.mxu0 0.0
    %893 = vmatprep.subr.mxu0 0.0
    %894 = vmatpush1.xpose.msra.mxu0 0.0
    %895 = vmatprep.subr.mxu0 0.0
    %896 = vmatpush1.xpose.msra.mxu0 0.0
    %897 = vmatprep.subr.mxu0 0.0
    %898 = vmatpush1.xpose.msra.mxu0 0.0
    %899 = vmatprep.subr.mxu0 0.0
    %900 = vmatpush1.xpose.msra.mxu0 0.0
    %901 = vmatprep.subr.mxu0 0.0
    %902 = vmatpush1.xpose.msra.mxu0 0.0
    %903 = vmatprep.subr.mxu0 0.0
    %904 = vmatpush1.xpose.msra.mxu0 0.0
    %905 = vmatprep.subr.mxu0 0.0
    %906 = vmatpush1.xpose.msra.mxu0 0.0
    %907 = vmatprep.subr.mxu0 0.0
    %908 = vmatpush1.xpose.msra.mxu0 0.0
    %909 = vmatprep.subr.mxu0 0.0
    %910 = vmatpush1.xpose.msra.mxu0 0.0
    %911 = vmatprep.subr.mxu0 0.0
    %912 = vmatpush1.xpose.msra.mxu0 0.0
    %913 = vmatprep.subr.mxu0 0.0
    %914 = vmatpush1.xpose.msra.mxu0 0.0
    %915 = vmatprep.mubr.f32.mxu0 0.0
    %916 = vmatmul.mubr.f32.gmra.mrb[0].mxu0 %v847
    %v917 = vpop.f32.mrb[0].mxu0
    %v918 = vadd.f32 0.0, %v917
    %v919 = vpop.f32.mrb[0].mxu0
    %920 = vdwg.mxu0
    %v921 = vsel %vm239, %v918, -inf
    %922 = vmax.xlane.f32.xlu0 %v921
    %v923 = vpop.xlane.xlu0 %922
    %v924 = vsub.f32 %v918, %v923
    %v925 = vmul.f32 %v924, 1.442695
    %v926 = vpow.pop %v925
    %v927 = vsel %vm239, %v926, 0.0
    %928 = vadd.xlane.f32.xlu0 %v927
    %v929 = vpop.xlane.xlu0 %928
    %v930 = vrcp.pop %v929
    %v931 = vmul.f32 %v926, %v930
    %v932 = vrot.slane %v159, 4
    %v934 = vsel %vm251, %v931, 0
    %v936 = vsel %vm255, %v932, 0
    %938 = vmatprep.subr.mxu0 0.0
    %939 = vmatpush1.msra.mxu0 %v936
    %940 = vmatprep.subr.mxu0 0.0
    %941 = vmatpush1.msra.mxu0 0.0
    %942 = vmatprep.subr.mxu0 0.0
    %943 = vmatpush1.msra.mxu0 0.0
    %944 = vmatprep.subr.mxu0 0.0
    %945 = vmatpush1.msra.mxu0 0.0
    %946 = vmatprep.subr.mxu0 0.0
    %947 = vmatpush1.msra.mxu0 0.0
    %948 = vmatprep.subr.mxu0 0.0
    %949 = vmatpush1.msra.mxu0 0.0
    %950 = vmatprep.subr.mxu0 0.0
    %951 = vmatpush1.msra.mxu0 0.0
    %952 = vmatprep.subr.mxu0 0.0
    %953 = vmatpush1.msra.mxu0 0.0
    %954 = vmatprep.subr.mxu0 0.0
    %955 = vmatpush1.msra.mxu0 0.0
    %956 = vmatprep.subr.mxu0 0.0
    %957 = vmatpush1.msra.mxu0 0.0
    %958 = vmatprep.subr.mxu0 0.0
    %959 = vmatpush1.msra.mxu0 0.0
    %960 = vmatprep.subr.mxu0 0.0
    %961 = vmatpush1.msra.mxu0 0.0
    %962 = vmatprep.subr.mxu0 0.0
    %963 = vmatpush1.msra.mxu0 0.0
    %964 = vmatprep.subr.mxu0 0.0
    %965 = vmatpush1.msra.mxu0 0.0
    %966 = vmatprep.subr.mxu0 0.0
    %967 = vmatpush1.msra.mxu0 0.0
    %968 = vmatprep.subr.mxu0 0.0
    %969 = vmatpush1.msra.mxu0 0.0
    %970 = vmatprep.subr.mxu0 0.0
    %971 = vmatpush1.msra.mxu0 0.0
    %972 = vmatprep.subr.mxu0 0.0
    %973 = vmatpush1.msra.mxu0 0.0
    %974 = vmatprep.subr.mxu0 0.0
    %975 = vmatpush1.msra.mxu0 0.0
    %976 = vmatprep.subr.mxu0 0.0
    %977 = vmatpush1.msra.mxu0 0.0
    %978 = vmatprep.subr.mxu0 0.0
    %979 = vmatpush1.msra.mxu0 0.0
    %980 = vmatprep.subr.mxu0 0.0
    %981 = vmatpush1.msra.mxu0 0.0
    %982 = vmatprep.subr.mxu0 0.0
    %983 = vmatpush1.msra.mxu0 0.0
    %984 = vmatprep.subr.mxu0 0.0
    %985 = vmatpush1.msra.mxu0 0.0
    %986 = vmatprep.subr.mxu0 0.0
    %987 = vmatpush1.msra.mxu0 0.0
    %988 = vmatprep.subr.mxu0 0.0
    %989 = vmatpush1.msra.mxu0 0.0
    %990 = vmatprep.subr.mxu0 0.0
    %991 = vmatpush1.msra.mxu0 0.0
    %992 = vmatprep.subr.mxu0 0.0
    %993 = vmatpush1.msra.mxu0 0.0
    %994 = vmatprep.subr.mxu0 0.0
    %995 = vmatpush1.msra.mxu0 0.0
    %996 = vmatprep.subr.mxu0 0.0
    %997 = vmatpush1.msra.mxu0 0.0
    %998 = vmatprep.subr.mxu0 0.0
    %999 = vmatpush1.msra.mxu0 0.0
    %1000 = vmatprep.subr.mxu0 0.0
    %1001 = vmatpush1.msra.mxu0 0.0
    %1002 = vmatprep.mubr.f32.mxu0 0.0
    %1003 = vmatmul.mubr.f32.gmra.mrb[0].mxu0 %v934
    %v1004 = vpop.f32.mrb[0].mxu0
    %v1005 = vadd.f32 0.0, %v1004
    %v1006 = vpop.f32.mrb[0].mxu0
    %1007 = vdwg.mxu0
    %1008 = vrot.lane.b32.xlu0 %v844, 112
    %v1009 = vpop.permute.xlu0 %1008
    %1010 = vrot.lane.b32.xlu0 %v844, 48
    %v1011 = vpop.permute.xlu0 %1010
    %v1012 = vsel %vm164, %v1009, 0
    %v1014 = vsel %vm164, %v1011, 0
    %1016 = vmatprep.subr.mxu0 0.0
    %1017 = vmatpush1.xpose.msra.mxu0 %v1014
    %1018 = vmatprep.subr.mxu0 0.0
    %1019 = vmatpush1.xpose.msra.mxu0 0.0
    %1020 = vmatprep.subr.mxu0 0.0
    %1021 = vmatpush1.xpose.msra.mxu0 0.0
    %1022 = vmatprep.subr.mxu0 0.0
    %1023 = vmatpush1.xpose.msra.mxu0 0.0
    %1024 = vmatprep.subr.mxu0 0.0
    %1025 = vmatpush1.xpose.msra.mxu0 0.0
    %1026 = vmatprep.subr.mxu0 0.0
    %1027 = vmatpush1.xpose.msra.mxu0 0.0
    %1028 = vmatprep.subr.mxu0 0.0
    %1029 = vmatpush1.xpose.msra.mxu0 0.0
    %1030 = vmatprep.subr.mxu0 0.0
    %1031 = vmatpush1.xpose.msra.mxu0 0.0
    %1032 = vmatprep.subr.mxu0 0.0
    %1033 = vmatpush1.xpose.msra.mxu0 0.0
    %1034 = vmatprep.subr.mxu0 0.0
    %1035 = vmatpush1.xpose.msra.mxu0 0.0
    %1036 = vmatprep.subr.mxu0 0.0
    %1037 = vmatpush1.xpose.msra.mxu0 0.0
    %1038 = vmatprep.subr.mxu0 0.0
    %1039 = vmatpush1.xpose.msra.mxu0 0.0
    %1040 = vmatprep.subr.mxu0 0.0
    %1041 = vmatpush1.xpose.msra.mxu0 0.0
    %1042 = vmatprep.subr.mxu0 0.0
    %1043 = vmatpush1.xpose.msra.mxu0 0.0
    %1044 = vmatprep.subr.mxu0 0.0
    %1045 = vmatpush1.xpose.msra.mxu0 0.0
    %1046 = vmatprep.subr.mxu0 0.0
    %1047 = vmatpush1.xpose.msra.mxu0 0.0
    %1048 = vmatprep.subr.mxu0 0.0
    %1049 = vmatpush1.xpose.msra.mxu0 0.0
    %1050 = vmatprep.subr.mxu0 0.0
    %1051 = vmatpush1.xpose.msra.mxu0 0.0
    %1052 = vmatprep.subr.mxu0 0.0
    %1053 = vmatpush1.xpose.msra.mxu0 0.0
    %1054 = vmatprep.subr.mxu0 0.0
    %1055 = vmatpush1.xpose.msra.mxu0 0.0
    %1056 = vmatprep.subr.mxu0 0.0
    %1057 = vmatpush1.xpose.msra.mxu0 0.0
    %1058 = vmatprep.subr.mxu0 0.0
    %1059 = vmatpush1.xpose.msra.mxu0 0.0
    %1060 = vmatprep.subr.mxu0 0.0
    %1061 = vmatpush1.xpose.msra.mxu0 0.0
    %1062 = vmatprep.subr.mxu0 0.0
    %1063 = vmatpush1.xpose.msra.mxu0 0.0
    %1064 = vmatprep.subr.mxu0 0.0
    %1065 = vmatpush1.xpose.msra.mxu0 0.0
    %1066 = vmatprep.subr.mxu0 0.0
    %1067 = vmatpush1.xpose.msra.mxu0 0.0
    %1068 = vmatprep.subr.mxu0 0.0
    %1069 = vmatpush1.xpose.msra.mxu0 0.0
    %1070 = vmatprep.subr.mxu0 0.0
    %1071 = vmatpush1.xpose.msra.mxu0 0.0
    %1072 = vmatprep.subr.mxu0 0.0
    %1073 = vmatpush1.xpose.msra.mxu0 0.0
    %1074 = vmatprep.subr.mxu0 0.0
    %1075 = vmatpush1.xpose.msra.mxu0 0.0
    %1076 = vmatprep.subr.mxu0 0.0
    %1077 = vmatpush1.xpose.msra.mxu0 0.0
    %1078 = vmatprep.subr.mxu0 0.0
    %1079 = vmatpush1.xpose.msra.mxu0 0.0
    %1080 = vmatprep.mubr.f32.mxu0 0.0
    %1081 = vmatmul.mubr.f32.gmra.mrb[0].mxu0 %v1012
    %v1082 = vpop.f32.mrb[0].mxu0
    %v1083 = vadd.f32 0.0, %v1082
    %v1084 = vpop.f32.mrb[0].mxu0
    %1085 = vdwg.mxu0
    %v1086 = vsel %vm239, %v1083, -inf
    %1087 = vmax.xlane.f32.xlu0 %v1086
    %v1088 = vpop.xlane.xlu0 %1087
    %v1089 = vsub.f32 %v1083, %v1088
    %v1090 = vmul.f32 %v1089, 1.442695
    %v1091 = vpow.pop %v1090
    %v1092 = vsel %vm239, %v1091, 0.0
    %1093 = vadd.xlane.f32.xlu0 %v1092
    %v1094 = vpop.xlane.xlu0 %1093
    %v1095 = vrcp.pop %v1094
    %v1096 = vmul.f32 %v1091, %v1095
    %1097 = vrot.lane.b32.xlu0 %v932, 112
    %v1098 = vpop.permute.xlu0 %1097
    %v1100 = vsel %vm251, %v1096, 0
    %v1102 = vsel %vm255, %v1098, 0
    %1104 = vmatprep.subr.mxu0 0.0
    %1105 = vmatpush1.msra.mxu0 %v1102
    %1106 = vmatprep.subr.mxu0 0.0
    %1107 = vmatpush1.msra.mxu0 0.0
    %1108 = vmatprep.subr.mxu0 0.0
    %1109 = vmatpush1.msra.mxu0 0.0
    %1110 = vmatprep.subr.mxu0 0.0
    %1111 = vmatpush1.msra.mxu0 0.0
    %1112 = vmatprep.subr.mxu0 0.0
    %1113 = vmatpush1.msra.mxu0 0.0
    %1114 = vmatprep.subr.mxu0 0.0
    %1115 = vmatpush1.msra.mxu0 0.0
    %1116 = vmatprep.subr.mxu0 0.0
    %1117 = vmatpush1.msra.mxu0 0.0
    %1118 = vmatprep.subr.mxu0 0.0
    %1119 = vmatpush1.msra.mxu0 0.0
    %1120 = vmatprep.subr.mxu0 0.0
    %1121 = vmatpush1.msra.mxu0 0.0
    %1122 = vmatprep.subr.mxu0 0.0
    %1123 = vmatpush1.msra.mxu0 0.0
    %1124 = vmatprep.subr.mxu0 0.0
    %1125 = vmatpush1.msra.mxu0 0.0
    %1126 = vmatprep.subr.mxu0 0.0
    %1127 = vmatpush1.msra.mxu0 0.0
    %1128 = vmatprep.subr.mxu0 0.0
    %1129 = vmatpush1.msra.mxu0 0.0
    %1130 = vmatprep.subr.mxu0 0.0
    %1131 = vmatpush1.msra.mxu0 0.0
    %1132 = vmatprep.subr.mxu0 0.0
    %1133 = vmatpush1.msra.mxu0 0.0
    %1134 = vmatprep.subr.mxu0 0.0
    %1135 = vmatpush1.msra.mxu0 0.0
    %1136 = vmatprep.subr.mxu0 0.0
    %1137 = vmatpush1.msra.mxu0 0.0
    %1138 = vmatprep.subr.mxu0 0.0
    %1139 = vmatpush1.msra.mxu0 0.0
    %1140 = vmatprep.subr.mxu0 0.0
    %1141 = vmatpush1.msra.mxu0 0.0
    %1142 = vmatprep.subr.mxu0 0.0
    %1143 = vmatpush1.msra.mxu0 0.0
    %1144 = vmatprep.subr.mxu0 0.0
    %1145 = vmatpush1.msra.mxu0 0.0
    %1146 = vmatprep.subr.mxu0 0.0
    %1147 = vmatpush1.msra.mxu0 0.0
    %1148 = vmatprep.subr.mxu0 0.0
    %1149 = vmatpush1.msra.mxu0 0.0
    %1150 = vmatprep.subr.mxu0 0.0
    %1151 = vmatpush1.msra.mxu0 0.0
    %1152 = vmatprep.subr.mxu0 0.0
    %1153 = vmatpush1.msra.mxu0 0.0
    %1154 = vmatprep.subr.mxu0 0.0
    %1155 = vmatpush1.msra.mxu0 0.0
    %1156 = vmatprep.subr.mxu0 0.0
    %1157 = vmatpush1.msra.mxu0 0.0
    %1158 = vmatprep.subr.mxu0 0.0
    %1159 = vmatpush1.msra.mxu0 0.0
    %1160 = vmatprep.subr.mxu0 0.0
    %1161 = vmatpush1.msra.mxu0 0.0
    %1162 = vmatprep.subr.mxu0 0.0
    %1163 = vmatpush1.msra.mxu0 0.0
    %1164 = vmatprep.subr.mxu0 0.0
    %1165 = vmatpush1.msra.mxu0 0.0
    %1166 = vmatprep.subr.mxu0 0.0
    %1167 = vmatpush1.msra.mxu0 0.0
    %1168 = vmatprep.mubr.f32.mxu0 0.0
    %1169 = vmatmul.mubr.f32.gmra.mrb[0].mxu0 %v1100
    %v1170 = vpop.f32.mrb[0].mxu0
    %v1171 = vadd.f32 0.0, %v1170
    %v1172 = vpop.f32.mrb[0].mxu0
    %1173 = vdwg.mxu0
    %1174 = vrot.lane.b32.xlu0 %v844, 96
    %v1175 = vpop.permute.xlu0 %1174
    %1176 = vrot.lane.b32.xlu0 %v844, 32
    %v1177 = vpop.permute.xlu0 %1176
    %v1178 = vsel %vm164, %v1175, 0
    %v1180 = vsel %vm164, %v1177, 0
    %1182 = vmatprep.subr.mxu0 0.0
    %1183 = vmatpush1.xpose.msra.mxu0 %v1180
    %1184 = vmatprep.subr.mxu0 0.0
    %1185 = vmatpush1.xpose.msra.mxu0 0.0
    %1186 = vmatprep.subr.mxu0 0.0
    %1187 = vmatpush1.xpose.msra.mxu0 0.0
    %1188 = vmatprep.subr.mxu0 0.0
    %1189 = vmatpush1.xpose.msra.mxu0 0.0
    %1190 = vmatprep.subr.mxu0 0.0
    %1191 = vmatpush1.xpose.msra.mxu0 0.0
    %1192 = vmatprep.subr.mxu0 0.0
    %1193 = vmatpush1.xpose.msra.mxu0 0.0
    %1194 = vmatprep.subr.mxu0 0.0
    %1195 = vmatpush1.xpose.msra.mxu0 0.0
    %1196 = vmatprep.subr.mxu0 0.0
    %1197 = vmatpush1.xpose.msra.mxu0 0.0
    %1198 = vmatprep.subr.mxu0 0.0
    %1199 = vmatpush1.xpose.msra.mxu0 0.0
    %1200 = vmatprep.subr.mxu0 0.0
    %1201 = vmatpush1.xpose.msra.mxu0 0.0
    %1202 = vmatprep.subr.mxu0 0.0
    %1203 = vmatpush1.xpose.msra.mxu0 0.0
    %1204 = vmatprep.subr.mxu0 0.0
    %1205 = vmatpush1.xpose.msra.mxu0 0.0
    %1206 = vmatprep.subr.mxu0 0.0
    %1207 = vmatpush1.xpose.msra.mxu0 0.0
    %1208 = vmatprep.subr.mxu0 0.0
    %1209 = vmatpush1.xpose.msra.mxu0 0.0
    %1210 = vmatprep.subr.mxu0 0.0
    %1211 = vmatpush1.xpose.msra.mxu0 0.0
    %1212 = vmatprep.subr.mxu0 0.0
    %1213 = vmatpush1.xpose.msra.mxu0 0.0
    %1214 = vmatprep.subr.mxu0 0.0
    %1215 = vmatpush1.xpose.msra.mxu0 0.0
    %1216 = vmatprep.subr.mxu0 0.0
    %1217 = vmatpush1.xpose.msra.mxu0 0.0
    %1218 = vmatprep.subr.mxu0 0.0
    %1219 = vmatpush1.xpose.msra.mxu0 0.0
    %1220 = vmatprep.subr.mxu0 0.0
    %1221 = vmatpush1.xpose.msra.mxu0 0.0
    %1222 = vmatprep.subr.mxu0 0.0
    %1223 = vmatpush1.xpose.msra.mxu0 0.0
    %1224 = vmatprep.subr.mxu0 0.0
    %1225 = vmatpush1.xpose.msra.mxu0 0.0
    %1226 = vmatprep.subr.mxu0 0.0
    %1227 = vmatpush1.xpose.msra.mxu0 0.0
    %1228 = vmatprep.subr.mxu0 0.0
    %1229 = vmatpush1.xpose.msra.mxu0 0.0
    %1230 = vmatprep.subr.mxu0 0.0
    %1231 = vmatpush1.xpose.msra.mxu0 0.0
    %1232 = vmatprep.subr.mxu0 0.0
    %1233 = vmatpush1.xpose.msra.mxu0 0.0
    %1234 = vmatprep.subr.mxu0 0.0
    %1235 = vmatpush1.xpose.msra.mxu0 0.0
    %1236 = vmatprep.subr.mxu0 0.0
    %1237 = vmatpush1.xpose.msra.mxu0 0.0
    %1238 = vmatprep.subr.mxu0 0.0
    %1239 = vmatpush1.xpose.msra.mxu0 0.0
    %1240 = vmatprep.subr.mxu0 0.0
    %1241 = vmatpush1.xpose.msra.mxu0 0.0
    %1242 = vmatprep.subr.mxu0 0.0
    %1243 = vmatpush1.xpose.msra.mxu0 0.0
    %1244 = vmatprep.subr.mxu0 0.0
    %1245 = vmatpush1.xpose.msra.mxu0 0.0
    %1246 = vmatprep.mubr.f32.mxu0 0.0
    %1247 = vmatmul.mubr.f32.gmra.mrb[0].mxu0 %v1178
    %v1248 = vpop.f32.mrb[0].mxu0
    %v1249 = vadd.f32 0.0, %v1248
    %v1250 = vpop.f32.mrb[0].mxu0
    %1251 = vdwg.mxu0
    %v1252 = vsel %vm239, %v1249, -inf
    %1253 = vmax.xlane.f32.xlu0 %v1252
    %v1254 = vpop.xlane.xlu0 %1253
    %v1255 = vsub.f32 %v1249, %v1254
    %v1256 = vmul.f32 %v1255, 1.442695
    %v1257 = vpow.pop %v1256
    %v1258 = vsel %vm239, %v1257, 0.0
    %1259 = vadd.xlane.f32.xlu0 %v1258
    %v1260 = vpop.xlane.xlu0 %1259
    %v1261 = vrcp.pop %v1260
    %v1262 = vmul.f32 %v1257, %v1261
    %1263 = vrot.lane.b32.xlu0 %v932, 96
    %v1264 = vpop.permute.xlu0 %1263
    %v1266 = vsel %vm251, %v1262, 0
    %v1268 = vsel %vm255, %v1264, 0
    %1270 = vmatprep.subr.mxu0 0.0
    %1271 = vmatpush1.msra.mxu0 %v1268
    %1272 = vmatprep.subr.mxu0 0.0
    %1273 = vmatpush1.msra.mxu0 0.0
    %1274 = vmatprep.subr.mxu0 0.0
    %1275 = vmatpush1.msra.mxu0 0.0
    %1276 = vmatprep.subr.mxu0 0.0
    %1277 = vmatpush1.msra.mxu0 0.0
    %1278 = vmatprep.subr.mxu0 0.0
    %1279 = vmatpush1.msra.mxu0 0.0
    %1280 = vmatprep.subr.mxu0 0.0
    %1281 = vmatpush1.msra.mxu0 0.0
    %1282 = vmatprep.subr.mxu0 0.0
    %1283 = vmatpush1.msra.mxu0 0.0
    %1284 = vmatprep.subr.mxu0 0.0
    %1285 = vmatpush1.msra.mxu0 0.0
    %1286 = vmatprep.subr.mxu0 0.0
    %1287 = vmatpush1.msra.mxu0 0.0
    %1288 = vmatprep.subr.mxu0 0.0
    %1289 = vmatpush1.msra.mxu0 0.0
    %1290 = vmatprep.subr.mxu0 0.0
    %1291 = vmatpush1.msra.mxu0 0.0
    %1292 = vmatprep.subr.mxu0 0.0
    %1293 = vmatpush1.msra.mxu0 0.0
    %1294 = vmatprep.subr.mxu0 0.0
    %1295 = vmatpush1.msra.mxu0 0.0
    %1296 = vmatprep.subr.mxu0 0.0
    %1297 = vmatpush1.msra.mxu0 0.0
    %1298 = vmatprep.subr.mxu0 0.0
    %1299 = vmatpush1.msra.mxu0 0.0
    %1300 = vmatprep.subr.mxu0 0.0
    %1301 = vmatpush1.msra.mxu0 0.0
    %1302 = vmatprep.subr.mxu0 0.0
    %1303 = vmatpush1.msra.mxu0 0.0
    %1304 = vmatprep.subr.mxu0 0.0
    %1305 = vmatpush1.msra.mxu0 0.0
    %1306 = vmatprep.subr.mxu0 0.0
    %1307 = vmatpush1.msra.mxu0 0.0
    %1308 = vmatprep.subr.mxu0 0.0
    %1309 = vmatpush1.msra.mxu0 0.0
    %1310 = vmatprep.subr.mxu0 0.0
    %1311 = vmatpush1.msra.mxu0 0.0
    %1312 = vmatprep.subr.mxu0 0.0
    %1313 = vmatpush1.msra.mxu0 0.0
    %1314 = vmatprep.subr.mxu0 0.0
    %1315 = vmatpush1.msra.mxu0 0.0
    %1316 = vmatprep.subr.mxu0 0.0
    %1317 = vmatpush1.msra.mxu0 0.0
    %1318 = vmatprep.subr.mxu0 0.0
    %1319 = vmatpush1.msra.mxu0 0.0
    %1320 = vmatprep.subr.mxu0 0.0
    %1321 = vmatpush1.msra.mxu0 0.0
    %1322 = vmatprep.subr.mxu0 0.0
    %1323 = vmatpush1.msra.mxu0 0.0
    %1324 = vmatprep.subr.mxu0 0.0
    %1325 = vmatpush1.msra.mxu0 0.0
    %1326 = vmatprep.subr.mxu0 0.0
    %1327 = vmatpush1.msra.mxu0 0.0
    %1328 = vmatprep.subr.mxu0 0.0
    %1329 = vmatpush1.msra.mxu0 0.0
    %1330 = vmatprep.subr.mxu0 0.0
    %1331 = vmatpush1.msra.mxu0 0.0
    %1332 = vmatprep.subr.mxu0 0.0
    %1333 = vmatpush1.msra.mxu0 0.0
    %1334 = vmatprep.mubr.f32.mxu0 0.0
    %1335 = vmatmul.mubr.f32.gmra.mrb[0].mxu0 %v1266
    %v1336 = vpop.f32.mrb[0].mxu0
    %v1337 = vadd.f32 0.0, %v1336
    %v1338 = vpop.f32.mrb[0].mxu0
    %1339 = vdwg.mxu0
    %1340 = vrot.lane.b32.xlu0 %v844, 80
    %v1341 = vpop.permute.xlu0 %1340
    %1342 = vrot.lane.b32.xlu0 %v844, 16
    %v1343 = vpop.permute.xlu0 %1342
    %v1344 = vsel %vm164, %v1341, 0
    %v1346 = vsel %vm164, %v1343, 0
    %1348 = vmatprep.subr.mxu0 0.0
    %1349 = vmatpush1.xpose.msra.mxu0 %v1346
    %1350 = vmatprep.subr.mxu0 0.0
    %1351 = vmatpush1.xpose.msra.mxu0 0.0
    %1352 = vmatprep.subr.mxu0 0.0
    %1353 = vmatpush1.xpose.msra.mxu0 0.0
    %1354 = vmatprep.subr.mxu0 0.0
    %1355 = vmatpush1.xpose.msra.mxu0 0.0
    %1356 = vmatprep.subr.mxu0 0.0
    %1357 = vmatpush1.xpose.msra.mxu0 0.0
    %1358 = vmatprep.subr.mxu0 0.0
    %1359 = vmatpush1.xpose.msra.mxu0 0.0
    %1360 = vmatprep.subr.mxu0 0.0
    %1361 = vmatpush1.xpose.msra.mxu0 0.0
    %1362 = vmatprep.subr.mxu0 0.0
    %1363 = vmatpush1.xpose.msra.mxu0 0.0
    %1364 = vmatprep.subr.mxu0 0.0
    %1365 = vmatpush1.xpose.msra.mxu0 0.0
    %1366 = vmatprep.subr.mxu0 0.0
    %1367 = vmatpush1.xpose.msra.mxu0 0.0
    %1368 = vmatprep.subr.mxu0 0.0
    %1369 = vmatpush1.xpose.msra.mxu0 0.0
    %1370 = vmatprep.subr.mxu0 0.0
    %1371 = vmatpush1.xpose.msra.mxu0 0.0
    %1372 = vmatprep.subr.mxu0 0.0
    %1373 = vmatpush1.xpose.msra.mxu0 0.0
    %1374 = vmatprep.subr.mxu0 0.0
    %1375 = vmatpush1.xpose.msra.mxu0 0.0
    %1376 = vmatprep.subr.mxu0 0.0
    %1377 = vmatpush1.xpose.msra.mxu0 0.0
    %1378 = vmatprep.subr.mxu0 0.0
    %1379 = vmatpush1.xpose.msra.mxu0 0.0
    %1380 = vmatprep.subr.mxu0 0.0
    %1381 = vmatpush1.xpose.msra.mxu0 0.0
    %1382 = vmatprep.subr.mxu0 0.0
    %1383 = vmatpush1.xpose.msra.mxu0 0.0
    %1384 = vmatprep.subr.mxu0 0.0
    %1385 = vmatpush1.xpose.msra.mxu0 0.0
    %1386 = vmatprep.subr.mxu0 0.0
    %1387 = vmatpush1.xpose.msra.mxu0 0.0
    %1388 = vmatprep.subr.mxu0 0.0
    %1389 = vmatpush1.xpose.msra.mxu0 0.0
    %1390 = vmatprep.subr.mxu0 0.0
    %1391 = vmatpush1.xpose.msra.mxu0 0.0
    %1392 = vmatprep.subr.mxu0 0.0
    %1393 = vmatpush1.xpose.msra.mxu0 0.0
    %1394 = vmatprep.subr.mxu0 0.0
    %1395 = vmatpush1.xpose.msra.mxu0 0.0
    %1396 = vmatprep.subr.mxu0 0.0
    %1397 = vmatpush1.xpose.msra.mxu0 0.0
    %1398 = vmatprep.subr.mxu0 0.0
    %1399 = vmatpush1.xpose.msra.mxu0 0.0
    %1400 = vmatprep.subr.mxu0 0.0
    %1401 = vmatpush1.xpose.msra.mxu0 0.0
    %1402 = vmatprep.subr.mxu0 0.0
    %1403 = vmatpush1.xpose.msra.mxu0 0.0
    %1404 = vmatprep.subr.mxu0 0.0
    %1405 = vmatpush1.xpose.msra.mxu0 0.0
    %1406 = vmatprep.subr.mxu0 0.0
    %1407 = vmatpush1.xpose.msra.mxu0 0.0
    %1408 = vmatprep.subr.mxu0 0.0
    %1409 = vmatpush1.xpose.msra.mxu0 0.0
    %1410 = vmatprep.subr.mxu0 0.0
    %1411 = vmatpush1.xpose.msra.mxu0 0.0
    %1412 = vmatprep.mubr.f32.mxu0 0.0
    %1413 = vmatmul.mubr.f32.gmra.mrb[0].mxu0 %v1344
    %v1414 = vpop.f32.mrb[0].mxu0
    %v1415 = vadd.f32 0.0, %v1414
    %v1416 = vpop.f32.mrb[0].mxu0
    %1417 = vdwg.mxu0
    %v1418 = vsel %vm239, %v1415, -inf
    %1419 = vmax.xlane.f32.xlu0 %v1418
    %v1420 = vpop.xlane.xlu0 %1419
    %v1421 = vsub.f32 %v1415, %v1420
    %v1422 = vmul.f32 %v1421, 1.442695
    %v1423 = vpow.pop %v1422
    %v1424 = vsel %vm239, %v1423, 0.0
    %1425 = vadd.xlane.f32.xlu0 %v1424
    %v1426 = vpop.xlane.xlu0 %1425
    %v1427 = vrcp.pop %v1426
    %v1428 = vmul.f32 %v1423, %v1427
    %1429 = vrot.lane.b32.xlu0 %v932, 80
    %v1430 = vpop.permute.xlu0 %1429
    %v1432 = vsel %vm251, %v1428, 0
    %v1434 = vsel %vm255, %v1430, 0
    %1436 = vmatprep.subr.mxu0 0.0
    %1437 = vmatpush1.msra.mxu0 %v1434
    %1438 = vmatprep.subr.mxu0 0.0
    %1439 = vmatpush1.msra.mxu0 0.0
    %1440 = vmatprep.subr.mxu0 0.0
    %1441 = vmatpush1.msra.mxu0 0.0
    %1442 = vmatprep.subr.mxu0 0.0
    %1443 = vmatpush1.msra.mxu0 0.0
    %1444 = vmatprep.subr.mxu0 0.0
    %1445 = vmatpush1.msra.mxu0 0.0
    %1446 = vmatprep.subr.mxu0 0.0
    %1447 = vmatpush1.msra.mxu0 0.0
    %1448 = vmatprep.subr.mxu0 0.0
    %1449 = vmatpush1.msra.mxu0 0.0
    %1450 = vmatprep.subr.mxu0 0.0
    %1451 = vmatpush1.msra.mxu0 0.0
    %1452 = vmatprep.subr.mxu0 0.0
    %1453 = vmatpush1.msra.mxu0 0.0
    %1454 = vmatprep.subr.mxu0 0.0
    %1455 = vmatpush1.msra.mxu0 0.0
    %1456 = vmatprep.subr.mxu0 0.0
    %1457 = vmatpush1.msra.mxu0 0.0
    %1458 = vmatprep.subr.mxu0 0.0
    %1459 = vmatpush1.msra.mxu0 0.0
    %1460 = vmatprep.subr.mxu0 0.0
    %1461 = vmatpush1.msra.mxu0 0.0
    %1462 = vmatprep.subr.mxu0 0.0
    %1463 = vmatpush1.msra.mxu0 0.0
    %1464 = vmatprep.subr.mxu0 0.0
    %1465 = vmatpush1.msra.mxu0 0.0
    %1466 = vmatprep.subr.mxu0 0.0
    %1467 = vmatpush1.msra.mxu0 0.0
    %1468 = vmatprep.subr.mxu0 0.0
    %1469 = vmatpush1.msra.mxu0 0.0
    %1470 = vmatprep.subr.mxu0 0.0
    %1471 = vmatpush1.msra.mxu0 0.0
    %1472 = vmatprep.subr.mxu0 0.0
    %1473 = vmatpush1.msra.mxu0 0.0
    %1474 = vmatprep.subr.mxu0 0.0
    %1475 = vmatpush1.msra.mxu0 0.0
    %1476 = vmatprep.subr.mxu0 0.0
    %1477 = vmatpush1.msra.mxu0 0.0
    %1478 = vmatprep.subr.mxu0 0.0
    %1479 = vmatpush1.msra.mxu0 0.0
    %1480 = vmatprep.subr.mxu0 0.0
    %1481 = vmatpush1.msra.mxu0 0.0
    %1482 = vmatprep.subr.mxu0 0.0
    %1483 = vmatpush1.msra.mxu0 0.0
    %1484 = vmatprep.subr.mxu0 0.0
    %1485 = vmatpush1.msra.mxu0 0.0
    %1486 = vmatprep.subr.mxu0 0.0
    %1487 = vmatpush1.msra.mxu0 0.0
    %1488 = vmatprep.subr.mxu0 0.0
    %1489 = vmatpush1.msra.mxu0 0.0
    %1490 = vmatprep.subr.mxu0 0.0
    %1491 = vmatpush1.msra.mxu0 0.0
    %1492 = vmatprep.subr.mxu0 0.0
    %1493 = vmatpush1.msra.mxu0 0.0
    %1494 = vmatprep.subr.mxu0 0.0
    %1495 = vmatpush1.msra.mxu0 0.0
    %1496 = vmatprep.subr.mxu0 0.0
    %1497 = vmatpush1.msra.mxu0 0.0
    %1498 = vmatprep.subr.mxu0 0.0
    %1499 = vmatpush1.msra.mxu0 0.0
    %1500 = vmatprep.mubr.f32.mxu0 0.0
    %1501 = vmatmul.mubr.f32.gmra.mrb[0].mxu0 %v1432
    %v1502 = vpop.f32.mrb[0].mxu0
    %v1503 = vadd.f32 0.0, %v1502
    %v1504 = vpop.f32.mrb[0].mxu0
    %1505 = vdwg.mxu0
    %1507 = vrot.lane.b32.xlu0 %v1171, 16
    %v1508 = vpop.permute.xlu0 %1507
    %1511 = vrot.lane.b32.xlu0 %v1337, 32
    %v1512 = vpop.permute.xlu0 %1511
    %1515 = vrot.lane.b32.xlu0 %v1503, 48
    %v1516 = vpop.permute.xlu0 %1515
    %v1518 = vsel %vm164, %v1005, %v1508
    %v1519 = vsel %vm840, %v1518, %v1512
    %v1520 = vsel %vm842, %v1519, %v1516
    %v1522 = vrot.slane %v1520, 4
    %v1524 = vsel %vm255, %v843, %v1522
    %v1525 = vld [vmem:[%s2] sm:$0xff]
    %v1526 = vld [vmem:[%s2 + $0x8] sm:$0xff]
    %v1527 = vld [vmem:[%s2 + $0x10] sm:$0xff]
    %v1528 = vld [vmem:[%s2 + $0x18] sm:$0xff]
    %v1529 = vld [vmem:[%s2 + $0x20] sm:$0xff]
    %v1530 = vld [vmem:[%s2 + $0x28] sm:$0xff]
    %v1531 = vld [vmem:[%s2 + $0x30] sm:$0xff]
    %v1532 = vld [vmem:[%s2 + $0x38] sm:$0xff]
    %v1533 = vld [vmem:[%s2 + $0x40] sm:$0xff]
    %v1534 = vld [vmem:[%s2 + $0x48] sm:$0xff]
    %v1535 = vld [vmem:[%s2 + $0x50] sm:$0xff]
    %v1536 = vld [vmem:[%s2 + $0x58] sm:$0xff]
    %v1537 = vld [vmem:[%s2 + $0x60] sm:$0xff]
    %v1538 = vld [vmem:[%s2 + $0x68] sm:$0xff]
    %v1539 = vld [vmem:[%s2 + $0x70] sm:$0xff]
    %v1540 = vld [vmem:[%s2 + $0x78] sm:$0xff]
    %v1541 = vld [vmem:[%s3] sm:$0x3]
    %v1543 = vlaneseq
    %v1544 = vshrl.u32 %v1543, 7
    %v1545 = vsub.s32 0, %v1544
    %v1546 = vrot.slane %v1541, %v1545
    %v1547 = vlaneseq
    %v1548 = vshrl.u32 %v1547, 7
    %v1549 = vsub.s32 1, %v1548
    %v1550 = vrot.slane %v1541, %v1549
    %vm1553 = vcmask 523264
    %v1555 = vsel %vm1553, %v1524, 0
    %1557 = vmatprep.subr.mxu0 %v1526
    %1558 = vmatpush1.msra.mxu0 %v1525
    %1559 = vmatprep.subr.mxu0 %v1528
    %1560 = vmatpush1.msra.mxu0 %v1527
    %1561 = vmatprep.subr.mxu0 %v1530
    %1562 = vmatpush1.msra.mxu0 %v1529
    %1563 = vmatprep.subr.mxu0 %v1532
    %1564 = vmatpush1.msra.mxu0 %v1531
    %1565 = vmatprep.subr.mxu0 %v1534
    %1566 = vmatpush1.msra.mxu0 %v1533
    %1567 = vmatprep.subr.mxu0 %v1536
    %1568 = vmatpush1.msra.mxu0 %v1535
    %1569 = vmatprep.subr.mxu0 %v1538
    %1570 = vmatpush1.msra.mxu0 %v1537
    %1571 = vmatprep.subr.mxu0 %v1540
    %1572 = vmatpush1.msra.mxu0 %v1539
    %1573 = vmatprep.subr.mxu0 0.0
    %1574 = vmatpush1.msra.mxu0 0.0
    %1575 = vmatprep.subr.mxu0 0.0
    %1576 = vmatpush1.msra.mxu0 0.0
    %1577 = vmatprep.subr.mxu0 0.0
    %1578 = vmatpush1.msra.mxu0 0.0
    %1579 = vmatprep.subr.mxu0 0.0
    %1580 = vmatpush1.msra.mxu0 0.0
    %1581 = vmatprep.subr.mxu0 0.0
    %1582 = vmatpush1.msra.mxu0 0.0
    %1583 = vmatprep.subr.mxu0 0.0
    %1584 = vmatpush1.msra.mxu0 0.0
    %1585 = vmatprep.subr.mxu0 0.0
    %1586 = vmatpush1.msra.mxu0 0.0
    %1587 = vmatprep.subr.mxu0 0.0
    %1588 = vmatpush1.msra.mxu0 0.0
    %1589 = vmatprep.subr.mxu0 0.0
    %1590 = vmatpush1.msra.mxu0 0.0
    %1591 = vmatprep.subr.mxu0 0.0
    %1592 = vmatpush1.msra.mxu0 0.0
    %1593 = vmatprep.subr.mxu0 0.0
    %1594 = vmatpush1.msra.mxu0 0.0
    %1595 = vmatprep.subr.mxu0 0.0
    %1596 = vmatpush1.msra.mxu0 0.0
    %1597 = vmatprep.subr.mxu0 0.0
    %1598 = vmatpush1.msra.mxu0 0.0
    %1599 = vmatprep.subr.mxu0 0.0
    %1600 = vmatpush1.msra.mxu0 0.0
    %1601 = vmatprep.subr.mxu0 0.0
    %1602 = vmatpush1.msra.mxu0 0.0
    %1603 = vmatprep.subr.mxu0 0.0
    %1604 = vmatpush1.msra.mxu0 0.0
    %1605 = vmatprep.subr.mxu0 0.0
    %1606 = vmatpush1.msra.mxu0 0.0
    %1607 = vmatprep.subr.mxu0 0.0
    %1608 = vmatpush1.msra.mxu0 0.0
    %1609 = vmatprep.subr.mxu0 0.0
    %1610 = vmatpush1.msra.mxu0 0.0
    %1611 = vmatprep.subr.mxu0 0.0
    %1612 = vmatpush1.msra.mxu0 0.0
    %1613 = vmatprep.subr.mxu0 0.0
    %1614 = vmatpush1.msra.mxu0 0.0
    %1615 = vmatprep.subr.mxu0 0.0
    %1616 = vmatpush1.msra.mxu0 0.0
    %1617 = vmatprep.subr.mxu0 0.0
    %1618 = vmatpush1.msra.mxu0 0.0
    %1619 = vmatprep.subr.mxu0 0.0
    %1620 = vmatpush1.msra.mxu0 0.0
    %1621 = vmatprep.mubr.f32.mxu0 0.0
    %1622 = vmatmul.mubr.f32.gmra.mrb[0].mxu0 %v1555
    %v1623 = vpop.f32.mrb[0].mxu0
    %v1624 = vadd.f32 %v1546, %v1623
    %v1625 = vpop.f32.mrb[0].mxu0
    %v1626 = vadd.f32 %v1550, %v1625
    %1627 = vdwg.mxu0
    %v1630 = vcombine.low %v1624, %v1626
    %v1631 = vcombine.high %v1624, %v1626
    %vm1634 = vcmask 556036
    %vm1635 = vmor %vm1634, %vm255
    %1636 = vst.msk [vmem:[#allocation2] sm:$0xff] %vm1635, %v1630
    %1637 = vst.msk [vmem:[#allocation2 + $0x8] sm:$0xff] %vm1635, %v1631
    // Predicated region
    $region18: #{tpu_custom_call.1} parent=1 // pred_check
      _
    $region19: #{tpu_custom_call.1} parent=1 // pred_check_branch
      %1639 = sbr.rel (0) target = $region21
    $region20: #{tpu_custom_call.1} parent=1 // pred_region
      %s1641 = ssub.s32 256, 256
      %1642 = vsyncadd [#allocation3], %s1641
      %s1643 = sshll.u32 [#allocation2], 4
      %s1644 = int_to_ptr.vmem [resolvable:$true] %s1643
      %1649 = dma.vmem_to_hbm [thread:$0]  %s1644, 256, %s4, [#allocation3], 128, 128, 8
    $region21: #{tpu_custom_call.1} parent=1 // pred_fallthru
      _
    // Predicated region
    $region22: #{tpu_custom_call.1} parent=1 // pred_check
      _
    $region23: #{tpu_custom_call.1} parent=1 // pred_check_branch
      %1651 = sbr.rel (0) target = $region25
    $region24: #{tpu_custom_call.1} parent=1 // pred_region
      %1652 = dma.done [#allocation3], 256
    $region25: #{tpu_custom_call.1} parent=1 // pred_fallthru
      _
    %1653 = vsyncpa [#allocation3], 1

</llo_original>
